<compile_context>
chip_gen: v5e
topology: v5e:2x2
jax: 0.10.0
libtpu: 0.0.40
codegen_flags: <defaults>
</compile_context>

<pallas_src>
import functools

import jax
import jax.numpy as jnp
from jax.experimental import pallas as pl
from jax.experimental.pallas import tpu as pltpu

_NEG_BIG = 1e30


def _round_up(v, m):
    return ((v + m - 1) // m) * m


# ----------------------------------------------------------------------------
# Fused kernel: grid step i = hop i (encoder GDN + online hop-softmax update);
# the decoder GDN + store run on the last step.
# ----------------------------------------------------------------------------
def fused_gdn_autoencoder_kernel(x_ref, bias_ref, ew_ref, ea_ref, aa_ref,
                                 dw_ref, da_ref, o_ref,
                                 m_sc, den_sc, acc_sc, *, enc_out, dec_out):
    i = pl.program_id(0)
    last = pl.num_programs(0) - 1

    # Additive edge bias for this hop: 0 on edges, -1e30 off edges.
    # bf16 in HBM (half-width O(N^2) stream); the add with d stays in f32.
    bias = bias_ref[0].astype(jnp.float32)                       # (N, N) dst-major

    def gdn(hin, w_ref, att_ref, out_dim, apply_elu):
        """One GDNLayer on the current hop graph.

        w_ref holds [W | W_diff] fused as (in_p, 2*out_p): a single MXU push
        produces both z and hd.
        out_j = act(z_j + sum_i alpha_ij (hd_i - hd_j)).
        """
        wc = w_ref[...]
        out_p = wc.shape[-1] // 2
        zh = jnp.dot(hin, wc, preferred_element_type=jnp.float32)  # (N, 2*out_p)
        z, hd = zh[:, :out_p], zh[:, out_p:]

        # Fold the edge-softmax denominator into the ex @ hd matmul by planting
        # a constant-1 column in an unused zero-padded lane of hd.
        fold_den = out_dim < out_p
        if fold_den:
            lane = jax.lax.broadcasted_iota(jnp.int32, hd.shape, 1)
            hd = jnp.where(lane == out_dim, 1.0, hd)

        att = att_ref[...]                                          # (1, out_p)
        # p_i = att . hd_i in both orientations (att is zero on padded lanes,
        # so the planted 1-column does not leak into p).
        p_col = jnp.sum(hd * att, axis=-1, keepdims=True)           # (N, 1) dst
        p_row = jax.lax.dot_general(                                # (1, N) src
            att, hd, (((1,), (1,)), ((), ())),
            preferred_element_type=jnp.float32)
        d = p_row - p_col                                           # d[j,i]=p_i-p_j
        # leaky_relu fused with the additive mask bias (off-edge -> ~-1e30).
        s = jnp.maximum(d, 0.01 * d) + bias
        m = jnp.max(s, axis=-1, keepdims=True)                      # (N, 1)
        ex = jnp.exp(s - m)                    # off-edge entries underflow to 0
        # bf16 inputs + f32 accumulation: native MXU path for the O(N^2*out) dot.
        agg = jnp.dot(ex.astype(jnp.bfloat16), hd.astype(jnp.bfloat16),
                      preferred_element_type=jnp.float32)           # (N, out_p)
        if fold_den:
            den = agg[:, out_dim:out_dim + 1]     # row-sum of ex, from the MXU
        else:
            den = jnp.sum(ex, axis=-1, keepdims=True)
        inv = pl.reciprocal(den)                                    # EUP, exact
        # deferred normalization: sum_i alpha_ij == 1 (in-degree >= 1 required).
        out = z + agg * inv - hd
        if apply_elu:
            out = jnp.where(out > 0.0, out,
                            jnp.exp(jnp.minimum(out, 0.0)) - 1.0)
        return out

    # --- encoder on the hop-i graph (shared encoder weights) -----------------
    h = x_ref[...]
    z_i = gdn(h, ew_ref, ea_ref, enc_out, True)                     # (N, HP)

    # --- online softmax over hops (running max / den / acc in VMEM) ----------
    e = jnp.sum(z_i * aa_ref[...], axis=-1, keepdims=True)          # (N, 1)
    e = jnp.maximum(e, 0.01 * e)                                    # leaky_relu

    @pl.when(i == 0)
    def _():
        m_sc[...] = jnp.full_like(m_sc, -_NEG_BIG)
        den_sc[...] = jnp.zeros_like(den_sc)
        acc_sc[...] = jnp.zeros_like(acc_sc)

    m_prev = m_sc[...]
    m_new = jnp.maximum(m_prev, e)
    corr = jnp.exp(m_prev - m_new)
    w_i = jnp.exp(e - m_new)
    den_sc[...] = corr * den_sc[...] + w_i
    acc_sc[...] = corr * acc_sc[...] + w_i * z_i
    m_sc[...] = m_new

    # --- decoder on the A^k graph (this step's bias), no activation ----------
    @pl.when(i == last)
    def _():
        zc = acc_sc[...] * pl.reciprocal(den_sc[...])
        out = gdn(zc, dw_ref, da_ref, dec_out, False)
        o_ref[...] = out.astype(o_ref.dtype)


def _fused_pallas_forward(x_p, bias, ew, ea, aa, dw, da, *, enc_out, dec_out):
    n, dp = x_p.shape
    hp = ew.shape[1] // 2
    k = bias.shape[0]
    c2 = lambda i: (0, 0)                     # constant index map -> resident
    kernel = functools.partial(fused_gdn_autoencoder_kernel,
                               enc_out=enc_out, dec_out=dec_out)
    return pl.pallas_call(
        kernel,
        grid=(k,),
        in_specs=[pl.BlockSpec((n, dp), c2),                       # x
                  pl.BlockSpec((1, n, n), lambda i: (i, 0, 0)),    # hop bias
                  pl.BlockSpec(ew.shape, c2),                      # enc [W|Wd]
                  pl.BlockSpec(ea.shape, c2),                      # enc att row
                  pl.BlockSpec(aa.shape, c2),                      # hop att row
                  pl.BlockSpec(dw.shape, c2),                      # dec [W|Wd]
                  pl.BlockSpec(da.shape, c2)],                     # dec att row
        out_specs=pl.BlockSpec((n, dp), c2),
        out_shape=jax.ShapeDtypeStruct((n, dp), jnp.float32),
        scratch_shapes=[pltpu.VMEM((n, 1), jnp.float32),    # running max
                        pltpu.VMEM((n, 1), jnp.float32),    # running denom
                        pltpu.VMEM((n, hp), jnp.float32)],  # running weighted sum
        compiler_params=pltpu.CompilerParams(
            dimension_semantics=("arbitrary",),
            vmem_limit_bytes=32 * 1024 * 1024),
    )(x_p, bias, ew, ea, aa, dw, da)


# ----------------------------------------------------------------------------
# Pure-JAX reference (original, un-simplified math) for the correctness check
# ----------------------------------------------------------------------------
def _ref_gdn_layer(h, mt, w_t, wd_t, att_row, activation):
    z = h @ w_t
    hd = h @ wd_t
    p = jnp.sum(hd * att_row, axis=-1, keepdims=True)               # (N, 1)
    s = p.reshape(1, -1) - p
    s = jnp.where(s >= 0.0, s, 0.01 * s)
    s_m = jnp.where(mt > 0.0, s, -1e30)
    m = jnp.max(s_m, axis=-1, keepdims=True)
    ex = jnp.exp(s_m - m) * mt
    den = jnp.sum(ex, axis=-1, keepdims=True)
    alpha = ex / jnp.maximum(den, 1e-20)
    out = z + alpha @ hd - hd * jnp.sum(alpha, axis=-1, keepdims=True)
    if activation == "elu":
        out = jnp.where(out > 0.0, out, jnp.exp(jnp.minimum(out, 0.0)) - 1.0)
    return out


def _ref_combine(zs, att_row):
    e = jnp.concatenate(
        [jnp.sum(z * att_row, axis=-1, keepdims=True) for z in zs], axis=-1)
    e = jnp.where(e >= 0.0, e, 0.01 * e)
    a = jax.nn.softmax(e, axis=-1)
    return sum(a[:, i:i + 1] * z for i, z in enumerate(zs))


# ----------------------------------------------------------------------------
# Full GDN_Autoencoder forward (glue in plain JAX, hot path in one kernel)
# ----------------------------------------------------------------------------
@functools.partial(jax.jit, static_argnames=("k", "use_ref"))
def gdn_autoencoder_forward(adj, x, params, k=3, use_ref=False):
    # dst-major k-hop reachability masks directly from powers of adj.T
    # ((A^m).T == (A.T)^m).  Powers in bf16: reachability only needs the sign
    # of positive sums.  TODO(synk): cache across calls when adj is static.
    adj_t = jnp.transpose(adj).astype(jnp.bfloat16)
    ak_t = adj_t
    mts = [(ak_t > 0).astype(jnp.float32)]
    for _ in range(k - 1):
        ak_t = jnp.dot(ak_t, adj_t)
        mts.append((ak_t > 0).astype(jnp.float32))

    if use_ref:
        zs = [_ref_gdn_layer(x, mt, params["enc_w_t"], params["enc_wd_t"],
                             params["enc_att_r"], "elu") for mt in mts]
        z = _ref_combine(zs, params["ae_att_r"])
        return _ref_gdn_layer(z, mts[-1], params["dec_w_t"], params["dec_wd_t"],
                              params["dec_att_r"], "none")

    n, in_dim = x.shape
    hidden_dim = params["enc_w_t"].shape[1]
    dp = _round_up(in_dim, 128)        # lane-dense feature dims
    hp = _round_up(hidden_dim, 128)

    def pad2(a, r, c):
        return jnp.pad(a, ((0, r - a.shape[0]), (0, c - a.shape[1])))

    x_p = pad2(x, n, dp)
    # Fused [W | W_diff] weights: one MXU push per GDNLayer call.
    ew = jnp.concatenate([pad2(params["enc_w_t"], dp, hp),
                          pad2(params["enc_wd_t"], dp, hp)], axis=1)   # (dp, 2hp)
    ea = pad2(params["enc_att_r"], 1, hp)
    aa = pad2(params["ae_att_r"], 1, hp)
    dw = jnp.concatenate([pad2(params["dec_w_t"], hp, dp),
                          pad2(params["dec_wd_t"], hp, dp)], axis=1)   # (hp, 2dp)
    da = pad2(params["dec_att_r"], 1, dp)
    # Additive edge-bias slab: 0 on edges, -1e30 off edges; bf16 halves the
    # only O(N^2) HBM stream (cast back to f32 in-kernel before the add).
    bias = ((jnp.stack(mts) - 1.0) * _NEG_BIG).astype(jnp.bfloat16)    # (k, N, N)

    out_p = _fused_pallas_forward(x_p, bias, ew, ea, aa, dw, da,
                                  enc_out=hidden_dim, dec_out=in_dim)
    return out_p[:, :in_dim]


# ----------------------------------------------------------------------------
# Deterministic parameter init (xavier_normal_, gain=calculate_gain('relu'))
# ----------------------------------------------------------------------------
def _xavier_normal(key, shape, gain):
    fan_out, fan_in = shape                     # torch convention for 2D weights
    std = gain * (2.0 / (fan_in + fan_out)) ** 0.5
    return std * jax.random.normal(key, shape, dtype=jnp.float32)


if __name__ == "__main__":
    n_nodes, in_dim, hidden_dim, k = 32, 16, 32, 3
    gain = 2.0 ** 0.5                            # nn.init.calculate_gain('relu')
    key = jax.random.PRNGKey(0)
    ks = jax.random.split(key, 9)

    # adjacency: adj[i, j] = 1 means edge src=i -> dst=j ; add self-loops so
    # every node has at least one incoming edge in every power of A.
    adj = (jax.random.uniform(ks[0], (n_nodes, n_nodes)) < 0.15).astype(jnp.float32)
    adj = jnp.clip(adj + jnp.eye(n_nodes, dtype=jnp.float32), 0.0, 1.0)
    # Hard precondition of the kernel (deferred normalization / masked-exp
    # simplifications): in-degree >= 1 for every destination in every A^m.
    assert bool(jnp.all(jnp.diag(adj) == 1.0)), "self-loops required"

    x = jax.random.normal(ks[1], (n_nodes, in_dim), dtype=jnp.float32)

    params = {
        # encoder GDNLayer(in_dim, hidden_dim): fc/diff_fc weight (hidden, in), att (hidden, 1)
        "enc_w_t": _xavier_normal(ks[2], (hidden_dim, in_dim), gain).T,
        "enc_wd_t": _xavier_normal(ks[3], (hidden_dim, in_dim), gain).T,
        "enc_att_r": _xavier_normal(ks[4], (hidden_dim, 1), gain).T,
        # decoder GDNLayer(hidden_dim, in_dim)
        "dec_w_t": _xavier_normal(ks[5], (in_dim, hidden_dim), gain).T,
        "dec_wd_t": _xavier_normal(ks[6], (in_dim, hidden_dim), gain).T,
        "dec_att_r": _xavier_normal(ks[7], (in_dim, 1), gain).T,
        # autoencoder-level attention (hidden_dim, 1)
        "ae_att_r": _xavier_normal(ks[8], (hidden_dim, 1), gain).T,
    }

    out = gdn_autoencoder_forward(adj, x, params, k=k)
    out = jax.block_until_ready(out)

    ref = gdn_autoencoder_forward(adj, x, params, k=k, use_ref=True)
    ref = jax.block_until_ready(ref)

    assert out.shape == (n_nodes, in_dim) and out.dtype == jnp.float32
    assert bool(jnp.all(jnp.isfinite(out)))
    max_err = float(jnp.max(jnp.abs(out - ref)))
    assert max_err < 5e-2, f"mismatch vs reference: {max_err}"
    print("KERNEL_OK")
</pallas_src>

<mosaic_0001>
module attributes {stable_mosaic.version = 11 : i64} {
  func.func @fused_gdn_autoencoder_kernel(%arg0: i32, %arg1: memref<32x128xf32, #tpu.memory_space<vmem>>, %arg2: memref<1x32x32xbf16, #tpu.memory_space<vmem>>, %arg3: memref<128x256xf32, #tpu.memory_space<vmem>>, %arg4: memref<1x128xf32, #tpu.memory_space<vmem>>, %arg5: memref<1x128xf32, #tpu.memory_space<vmem>>, %arg6: memref<128x256xf32, #tpu.memory_space<vmem>>, %arg7: memref<1x128xf32, #tpu.memory_space<vmem>>, %arg8: memref<32x128xf32, #tpu.memory_space<vmem>>, %arg9: memref<32x1xf32, #tpu.memory_space<vmem>>, %arg10: memref<32x1xf32, #tpu.memory_space<vmem>>, %arg11: memref<32x128xf32, #tpu.memory_space<vmem>>) attributes {dimension_semantics = [#tpu.dimension_semantics<arbitrary>], iteration_bounds = array<i64: 3>, scalar_prefetch = 0 : i64, scratch_operands = 3 : i64, tpu.core_type = #tpu.core_type<tc>, window_params = [{pipeline_mode = #tpu.pipeline_mode<synchronous>, transform_indices = @transform_0, window_bounds = array<i64: 32, 128>}, {transform_indices = @transform_1, window_bounds = array<i64: 1, 32, 32>}, {pipeline_mode = #tpu.pipeline_mode<synchronous>, transform_indices = @transform_2, window_bounds = array<i64: 128, 256>}, {pipeline_mode = #tpu.pipeline_mode<synchronous>, transform_indices = @transform_3, window_bounds = array<i64: 1, 128>}, {pipeline_mode = #tpu.pipeline_mode<synchronous>, transform_indices = @transform_4, window_bounds = array<i64: 1, 128>}, {pipeline_mode = #tpu.pipeline_mode<synchronous>, transform_indices = @transform_5, window_bounds = array<i64: 128, 256>}, {pipeline_mode = #tpu.pipeline_mode<synchronous>, transform_indices = @transform_6, window_bounds = array<i64: 1, 128>}, {pipeline_mode = #tpu.pipeline_mode<synchronous>, transform_indices = @transform_7, window_bounds = array<i64: 32, 128>}]} {
    %c0 = arith.constant 0 : index
    %c0_0 = arith.constant 0 : index
    %c0_1 = arith.constant 0 : index
    %0 = vector.load %arg2[%c0, %c0_0, %c0_1] : memref<1x32x32xbf16, #tpu.memory_space<vmem>>, vector<1x32x32xbf16>
    %1 = vector.shape_cast %0 : vector<1x32x32xbf16> to vector<32x32xbf16>
    %2 = arith.extf %1 : vector<32x32xbf16> to vector<32x32xf32>
    %c0_2 = arith.constant 0 : index
    %c0_3 = arith.constant 0 : index
    %3 = vector.load %arg1[%c0_2, %c0_3] : memref<32x128xf32, #tpu.memory_space<vmem>>, vector<32x128xf32>
    %c0_4 = arith.constant 0 : index
    %c0_5 = arith.constant 0 : index
    %4 = vector.load %arg3[%c0_4, %c0_5] : memref<128x256xf32, #tpu.memory_space<vmem>>, vector<128x256xf32>
    %cst = arith.constant dense<0.000000e+00> : vector<32x256xf32>
    %5 = tpu.matmul %3, %4, %cst {dimension_numbers = #tpu.dot_dimension_numbers<[1], [0], [0], [1], [0, 0, 1, 1], [], []>} : vector<32x128xf32>, vector<128x256xf32>, vector<32x256xf32> -> vector<32x256xf32>
    %6 = vector.extract_strided_slice %5 {offsets = [0, 0], sizes = [32, 128], strides = [1, 1]} : vector<32x256xf32> to vector<32x128xf32>
    %7 = vector.extract_strided_slice %5 {offsets = [0, 128], sizes = [32, 128], strides = [1, 1]} : vector<32x256xf32> to vector<32x128xf32>
    %8 = tpu.iota {dimensions = array<i32: 1>} : vector<32x128xi32>
    %c32_i32 = arith.constant 32 : i32
    %9 = vector.broadcast %c32_i32 : i32 to vector<32x128xi32>
    %10 = arith.cmpi eq, %8, %9 : vector<32x128xi32>
    %cst_6 = arith.constant 1.000000e+00 : f32
    %11 = vector.broadcast %cst_6 : f32 to vector<32x128xf32>
    %12 = arith.select %10, %11, %7 : vector<32x128xi1>, vector<32x128xf32>
    %c0_7 = arith.constant 0 : index
    %c0_8 = arith.constant 0 : index
    %13 = vector.load %arg4[%c0_7, %c0_8] : memref<1x128xf32, #tpu.memory_space<vmem>>, vector<1x128xf32>
    %14 = vector.broadcast %13 : vector<1x128xf32> to vector<32x128xf32>
    %15 = arith.mulf %12, %14 : vector<32x128xf32>
    %cst_9 = arith.constant dense<0.000000e+00> : vector<32xf32>
    %16 = vector.multi_reduction <add>, %15, %cst_9 [1] : vector<32x128xf32> to vector<32xf32>
    %17 = vector.shape_cast %16 : vector<32xf32> to vector<32x1xf32>
    %cst_10 = arith.constant dense<0.000000e+00> : vector<1x32xf32>
    %18 = tpu.matmul %13, %12, %cst_10 {dimension_numbers = #tpu.dot_dimension_numbers<[1], [1], [0], [0], [0, 0, 1, 0], [], []>} : vector<1x128xf32>, vector<32x128xf32>, vector<1x32xf32> -> vector<1x32xf32>
    %19 = vector.broadcast %18 : vector<1x32xf32> to vector<32x32xf32>
    %20 = vector.broadcast %17 : vector<32x1xf32> to vector<32x32xf32>
    %21 = arith.subf %19, %20 : vector<32x32xf32>
    %cst_11 = arith.constant 0.00999999977 : f32
    %22 = vector.broadcast %cst_11 : f32 to vector<32x32xf32>
    %23 = arith.mulf %22, %21 : vector<32x32xf32>
    %24 = arith.maximumf %21, %23 : vector<32x32xf32>
    %25 = arith.addf %24, %2 : vector<32x32xf32>
    %cst_12 = arith.constant dense<0xFF800000> : vector<32xf32>
    %26 = vector.multi_reduction <maximumf>, %25, %cst_12 [1] : vector<32x32xf32> to vector<32xf32>
    %27 = vector.shape_cast %26 : vector<32xf32> to vector<32x1xf32>
    %28 = vector.broadcast %27 : vector<32x1xf32> to vector<32x32xf32>
    %29 = arith.subf %25, %28 : vector<32x32xf32>
    %30 = math.exp %29 : vector<32x32xf32>
    %31 = arith.truncf %30 : vector<32x32xf32> to vector<32x32xbf16>
    %32 = arith.truncf %12 : vector<32x128xf32> to vector<32x128xbf16>
    %cst_13 = arith.constant dense<0.000000e+00> : vector<32x128xf32>
    %33 = tpu.matmul %31, %32, %cst_13 {dimension_numbers = #tpu.dot_dimension_numbers<[1], [0], [0], [1], [0, 0, 1, 1], [], []>} : vector<32x32xbf16>, vector<32x128xbf16>, vector<32x128xf32> -> vector<32x128xf32>
    %34 = vector.extract_strided_slice %33 {offsets = [0, 32], sizes = [32, 1], strides = [1, 1]} : vector<32x128xf32> to vector<32x1xf32>
    %35 = tpu.reciprocal %34 : vector<32x1xf32> -> vector<32x1xf32>
    %36 = vector.broadcast %35 : vector<32x1xf32> to vector<32x128xf32>
    %37 = arith.mulf %33, %36 : vector<32x128xf32>
    %38 = arith.addf %6, %37 : vector<32x128xf32>
    %39 = arith.subf %38, %12 : vector<32x128xf32>
    %cst_14 = arith.constant 0.000000e+00 : f32
    %40 = vector.broadcast %cst_14 : f32 to vector<32x128xf32>
    %41 = arith.cmpf ogt, %39, %40 : vector<32x128xf32>
    %cst_15 = arith.constant 0.000000e+00 : f32
    %42 = vector.broadcast %cst_15 : f32 to vector<32x128xf32>
    %43 = arith.minimumf %39, %42 : vector<32x128xf32>
    %44 = math.exp %43 : vector<32x128xf32>
    %cst_16 = arith.constant 1.000000e+00 : f32
    %45 = vector.broadcast %cst_16 : f32 to vector<32x128xf32>
    %46 = arith.subf %44, %45 : vector<32x128xf32>
    %47 = arith.select %41, %39, %46 : vector<32x128xi1>, vector<32x128xf32>
    %c0_17 = arith.constant 0 : index
    %c0_18 = arith.constant 0 : index
    %48 = vector.load %arg5[%c0_17, %c0_18] : memref<1x128xf32, #tpu.memory_space<vmem>>, vector<1x128xf32>
    %49 = vector.broadcast %48 : vector<1x128xf32> to vector<32x128xf32>
    %50 = arith.mulf %47, %49 : vector<32x128xf32>
    %cst_19 = arith.constant dense<0.000000e+00> : vector<32xf32>
    %51 = vector.multi_reduction <add>, %50, %cst_19 [1] : vector<32x128xf32> to vector<32xf32>
    %52 = vector.shape_cast %51 : vector<32xf32> to vector<32x1xf32>
    %cst_20 = arith.constant 0.00999999977 : f32
    %53 = vector.broadcast %cst_20 : f32 to vector<32x1xf32>
    %54 = arith.mulf %53, %52 : vector<32x1xf32>
    %55 = arith.maximumf %52, %54 : vector<32x1xf32>
    %c0_i32 = arith.constant 0 : i32
    %56 = arith.cmpi eq, %arg0, %c0_i32 : i32
    %57 = arith.extui %56 : i1 to i32
    %c0_i32_21 = arith.constant 0 : i32
    %58 = arith.cmpi ne, %57, %c0_i32_21 : i32
    scf.if %58 {
      %cst_35 = arith.constant -1.000000e+30 : f32
      %80 = vector.broadcast %cst_35 : f32 to vector<32x1xf32>
      %c0_36 = arith.constant 0 : index
      %c0_37 = arith.constant 0 : index
      %81 = vector.load %arg9[%c0_36, %c0_37] : memref<32x1xf32, #tpu.memory_space<vmem>>, vector<32x1xf32>
      tpu.vector_store %arg9[%c0_36, %c0_37], %80 {strides = array<i32>} : memref<32x1xf32, #tpu.memory_space<vmem>>, vector<32x1xf32>,
      %cst_38 = arith.constant 0.000000e+00 : f32
      %82 = vector.broadcast %cst_38 : f32 to vector<32x1xf32>
      %c0_39 = arith.constant 0 : index
      %c0_40 = arith.constant 0 : index
      %83 = vector.load %arg10[%c0_39, %c0_40] : memref<32x1xf32, #tpu.memory_space<vmem>>, vector<32x1xf32>
      tpu.vector_store %arg10[%c0_39, %c0_40], %82 {strides = array<i32>} : memref<32x1xf32, #tpu.memory_space<vmem>>, vector<32x1xf32>,
      %cst_41 = arith.constant 0.000000e+00 : f32
      %84 = vector.broadcast %cst_41 : f32 to vector<32x128xf32>
      %c0_42 = arith.constant 0 : index
      %c0_43 = arith.constant 0 : index
      %85 = vector.load %arg11[%c0_42, %c0_43] : memref<32x128xf32, #tpu.memory_space<vmem>>, vector<32x128xf32>
      tpu.vector_store %arg11[%c0_42, %c0_43], %84 {strides = array<i32>} : memref<32x128xf32, #tpu.memory_space<vmem>>, vector<32x128xf32>,
    } else {
    }
    %c0_22 = arith.constant 0 : index
    %c0_23 = arith.constant 0 : index
    %59 = vector.load %arg9[%c0_22, %c0_23] : memref<32x1xf32, #tpu.memory_space<vmem>>, vector<32x1xf32>
    %60 = arith.maximumf %59, %55 : vector<32x1xf32>
    %61 = arith.subf %59, %60 : vector<32x1xf32>
    %62 = math.exp %61 : vector<32x1xf32>
    %63 = arith.subf %55, %60 : vector<32x1xf32>
    %64 = math.exp %63 : vector<32x1xf32>
    %c0_24 = arith.constant 0 : index
    %c0_25 = arith.constant 0 : index
    %65 = vector.load %arg10[%c0_24, %c0_25] : memref<32x1xf32, #tpu.memory_space<vmem>>, vector<32x1xf32>
    %66 = arith.mulf %62, %65 : vector<32x1xf32>
    %67 = arith.addf %66, %64 : vector<32x1xf32>
    %c0_26 = arith.constant 0 : index
    %c0_27 = arith.constant 0 : index
    %68 = vector.load %arg10[%c0_26, %c0_27] : memref<32x1xf32, #tpu.memory_space<vmem>>, vector<32x1xf32>
    tpu.vector_store %arg10[%c0_26, %c0_27], %67 {strides = array<i32>} : memref<32x1xf32, #tpu.memory_space<vmem>>, vector<32x1xf32>,
    %c0_28 = arith.constant 0 : index
    %c0_29 = arith.constant 0 : index
    %69 = vector.load %arg11[%c0_28, %c0_29] : memref<32x128xf32, #tpu.memory_space<vmem>>, vector<32x128xf32>
    %70 = vector.broadcast %62 : vector<32x1xf32> to vector<32x128xf32>
    %71 = arith.mulf %70, %69 : vector<32x128xf32>
    %72 = vector.broadcast %64 : vector<32x1xf32> to vector<32x128xf32>
    %73 = arith.mulf %72, %47 : vector<32x128xf32>
    %74 = arith.addf %71, %73 : vector<32x128xf32>
    %c0_30 = arith.constant 0 : index
    %c0_31 = arith.constant 0 : index
    %75 = vector.load %arg11[%c0_30, %c0_31] : memref<32x128xf32, #tpu.memory_space<vmem>>, vector<32x128xf32>
    tpu.vector_store %arg11[%c0_30, %c0_31], %74 {strides = array<i32>} : memref<32x128xf32, #tpu.memory_space<vmem>>, vector<32x128xf32>,
    %c0_32 = arith.constant 0 : index
    %c0_33 = arith.constant 0 : index
    %76 = vector.load %arg9[%c0_32, %c0_33] : memref<32x1xf32, #tpu.memory_space<vmem>>, vector<32x1xf32>
    tpu.vector_store %arg9[%c0_32, %c0_33], %60 {strides = array<i32>} : memref<32x1xf32, #tpu.memory_space<vmem>>, vector<32x1xf32>,
    %c2_i32 = arith.constant 2 : i32
    %77 = arith.cmpi eq, %arg0, %c2_i32 : i32
    %78 = arith.extui %77 : i1 to i32
    %c0_i32_34 = arith.constant 0 : i32
    %79 = arith.cmpi ne, %78, %c0_i32_34 : i32
    scf.if %79 {
      %c0_35 = arith.constant 0 : index
      %c0_36 = arith.constant 0 : index
      %80 = vector.load %arg11[%c0_35, %c0_36] : memref<32x128xf32, #tpu.memory_space<vmem>>, vector<32x128xf32>
      %c0_37 = arith.constant 0 : index
      %c0_38 = arith.constant 0 : index
      %81 = vector.load %arg10[%c0_37, %c0_38] : memref<32x1xf32, #tpu.memory_space<vmem>>, vector<32x1xf32>
      %82 = tpu.reciprocal %81 : vector<32x1xf32> -> vector<32x1xf32>
      %83 = vector.broadcast %82 : vector<32x1xf32> to vector<32x128xf32>
      %84 = arith.mulf %80, %83 : vector<32x128xf32>
      %c0_39 = arith.constant 0 : index
      %c0_40 = arith.constant 0 : index
      %85 = vector.load %arg6[%c0_39, %c0_40] : memref<128x256xf32, #tpu.memory_space<vmem>>, vector<128x256xf32>
      %cst_41 = arith.constant dense<0.000000e+00> : vector<32x256xf32>
      %86 = tpu.matmul %84, %85, %cst_41 {dimension_numbers = #tpu.dot_dimension_numbers<[1], [0], [0], [1], [0, 0, 1, 1], [], []>} : vector<32x128xf32>, vector<128x256xf32>, vector<32x256xf32> -> vector<32x256xf32>
      %87 = vector.extract_strided_slice %86 {offsets = [0, 0], sizes = [32, 128], strides = [1, 1]} : vector<32x256xf32> to vector<32x128xf32>
      %88 = vector.extract_strided_slice %86 {offsets = [0, 128], sizes = [32, 128], strides = [1, 1]} : vector<32x256xf32> to vector<32x128xf32>
      %89 = tpu.iota {dimensions = array<i32: 1>} : vector<32x128xi32>
      %c16_i32 = arith.constant 16 : i32
      %90 = vector.broadcast %c16_i32 : i32 to vector<32x128xi32>
      %91 = arith.cmpi eq, %89, %90 : vector<32x128xi32>
      %cst_42 = arith.constant 1.000000e+00 : f32
      %92 = vector.broadcast %cst_42 : f32 to vector<32x128xf32>
      %93 = arith.select %91, %92, %88 : vector<32x128xi1>, vector<32x128xf32>
      %c0_43 = arith.constant 0 : index
      %c0_44 = arith.constant 0 : index
      %94 = vector.load %arg7[%c0_43, %c0_44] : memref<1x128xf32, #tpu.memory_space<vmem>>, vector<1x128xf32>
      %95 = vector.broadcast %94 : vector<1x128xf32> to vector<32x128xf32>
      %96 = arith.mulf %93, %95 : vector<32x128xf32>
      %cst_45 = arith.constant dense<0.000000e+00> : vector<32xf32>
      %97 = vector.multi_reduction <add>, %96, %cst_45 [1] : vector<32x128xf32> to vector<32xf32>
      %98 = vector.shape_cast %97 : vector<32xf32> to vector<32x1xf32>
      %cst_46 = arith.constant dense<0.000000e+00> : vector<1x32xf32>
      %99 = tpu.matmul %94, %93, %cst_46 {dimension_numbers = #tpu.dot_dimension_numbers<[1], [1], [0], [0], [0, 0, 1, 0], [], []>} : vector<1x128xf32>, vector<32x128xf32>, vector<1x32xf32> -> vector<1x32xf32>
      %100 = vector.broadcast %99 : vector<1x32xf32> to vector<32x32xf32>
      %101 = vector.broadcast %98 : vector<32x1xf32> to vector<32x32xf32>
      %102 = arith.subf %100, %101 : vector<32x32xf32>
      %cst_47 = arith.constant 0.00999999977 : f32
      %103 = vector.broadcast %cst_47 : f32 to vector<32x32xf32>
      %104 = arith.mulf %103, %102 : vector<32x32xf32>
      %105 = arith.maximumf %102, %104 : vector<32x32xf32>
      %106 = arith.addf %105, %2 : vector<32x32xf32>
      %cst_48 = arith.constant dense<0xFF800000> : vector<32xf32>
      %107 = vector.multi_reduction <maximumf>, %106, %cst_48 [1] : vector<32x32xf32> to vector<32xf32>
      %108 = vector.shape_cast %107 : vector<32xf32> to vector<32x1xf32>
      %109 = vector.broadcast %108 : vector<32x1xf32> to vector<32x32xf32>
      %110 = arith.subf %106, %109 : vector<32x32xf32>
      %111 = math.exp %110 : vector<32x32xf32>
      %112 = arith.truncf %111 : vector<32x32xf32> to vector<32x32xbf16>
      %113 = arith.truncf %93 : vector<32x128xf32> to vector<32x128xbf16>
      %cst_49 = arith.constant dense<0.000000e+00> : vector<32x128xf32>
      %114 = tpu.matmul %112, %113, %cst_49 {dimension_numbers = #tpu.dot_dimension_numbers<[1], [0], [0], [1], [0, 0, 1, 1], [], []>} : vector<32x32xbf16>, vector<32x128xbf16>, vector<32x128xf32> -> vector<32x128xf32>
      %115 = vector.extract_strided_slice %114 {offsets = [0, 16], sizes = [32, 1], strides = [1, 1]} : vector<32x128xf32> to vector<32x1xf32>
      %116 = tpu.reciprocal %115 : vector<32x1xf32> -> vector<32x1xf32>
      %117 = vector.broadcast %116 : vector<32x1xf32> to vector<32x128xf32>
      %118 = arith.mulf %114, %117 : vector<32x128xf32>
      %119 = arith.addf %87, %118 : vector<32x128xf32>
      %120 = arith.subf %119, %93 : vector<32x128xf32>
      %c0_50 = arith.constant 0 : index
      %c0_51 = arith.constant 0 : index
      %121 = vector.load %arg8[%c0_50, %c0_51] : memref<32x128xf32, #tpu.memory_space<vmem>>, vector<32x128xf32>
      tpu.vector_store %arg8[%c0_50, %c0_51], %120 {strides = array<i32>} : memref<32x128xf32, #tpu.memory_space<vmem>>, vector<32x128xf32>,
    } else {
    }
    return
  }
  func.func @transform_0(%arg0: i32) -> (i32, i32) {
    %c0_i32 = arith.constant 0 : i32
    %c0_i32_0 = arith.constant 0 : i32
    %c0_i32_1 = arith.constant 0 : i32
    return %c0_i32, %c0_i32_0 : i32, i32
  }
  func.func @transform_1(%arg0: i32) -> (i32, i32, i32) {
    %c0_i32 = arith.constant 0 : i32
    %c0_i32_0 = arith.constant 0 : i32
    %c0_i32_1 = arith.constant 0 : i32
    return %arg0, %c0_i32, %c0_i32_0 : i32, i32, i32
  }
  func.func @transform_2(%arg0: i32) -> (i32, i32) {
    %c0_i32 = arith.constant 0 : i32
    %c0_i32_0 = arith.constant 0 : i32
    %c0_i32_1 = arith.constant 0 : i32
    return %c0_i32, %c0_i32_0 : i32, i32
  }
  func.func @transform_3(%arg0: i32) -> (i32, i32) {
    %c0_i32 = arith.constant 0 : i32
    %c0_i32_0 = arith.constant 0 : i32
    %c0_i32_1 = arith.constant 0 : i32
    return %c0_i32, %c0_i32_0 : i32, i32
  }
  func.func @transform_4(%arg0: i32) -> (i32, i32) {
    %c0_i32 = arith.constant 0 : i32
    %c0_i32_0 = arith.constant 0 : i32
    %c0_i32_1 = arith.constant 0 : i32
    return %c0_i32, %c0_i32_0 : i32, i32
  }
  func.func @transform_5(%arg0: i32) -> (i32, i32) {
    %c0_i32 = arith.constant 0 : i32
    %c0_i32_0 = arith.constant 0 : i32
    %c0_i32_1 = arith.constant 0 : i32
    return %c0_i32, %c0_i32_0 : i32, i32
  }
  func.func @transform_6(%arg0: i32) -> (i32, i32) {
    %c0_i32 = arith.constant 0 : i32
    %c0_i32_0 = arith.constant 0 : i32
    %c0_i32_1 = arith.constant 0 : i32
    return %c0_i32, %c0_i32_0 : i32, i32
  }
  func.func @transform_7(%arg0: i32) -> (i32, i32) {
    %c0_i32 = arith.constant 0 : i32
    %c0_i32_0 = arith.constant 0 : i32
    %c0_i32_1 = arith.constant 0 : i32
    return %c0_i32, %c0_i32_0 : i32, i32
  }
}

</mosaic_0001>

<llo_original>
// kernel: gdn_autoencoder_forward.1
$region0: #{gdn_autoencoder_forward.1}
  #allocation0 [shape = 'u32[]', space=smem, size = 0x4, offset = 0x4, fixed_abs, tag = 'smem constant byte address 0x4 - core index']
  #allocation1 [shape = 'u32[72,128]{1,0:T(1,128)}', space=vmem, size = 0x9000, scoped, tag = 'internal scratch']
  #allocation2 [shape = 'f32[32,1]{1,0:T(8,128)}', space=vmem, size = 0x4000, scoped, tag = 'scratch operand']
  #allocation3 [shape = 'f32[32,1]{1,0:T(8,128)}', space=vmem, size = 0x4000, scoped, tag = 'scratch operand']
  #allocation4 [shape = 'f32[32,128]{1,0:T(8,128)}', space=vmem, size = 0x4000, scoped, tag = 'scratch operand']
  %s0 = inlined_call_operand.vmem [shape: f32[32,128], index: 0, kind: input, shape index: {}]
  %s1 = inlined_call_operand.vmem [shape: bf16[3,32,32], index: 1, kind: input, shape index: {}]
  %s2 = inlined_call_operand.vmem [shape: f32[128,256], index: 2, kind: input, shape index: {}]
  %s3 = inlined_call_operand.vmem [shape: f32[1,128], index: 3, kind: input, shape index: {}]
  %s4 = inlined_call_operand.vmem [shape: f32[1,128], index: 4, kind: input, shape index: {}]
  %s5 = inlined_call_operand.vmem [shape: f32[128,256], index: 5, kind: input, shape index: {}]
  %s6 = inlined_call_operand.vmem [shape: f32[1,128], index: 6, kind: input, shape index: {}]
  %s7 = inlined_call_operand.vmem [shape: f32[32,128], index: 7, kind: output, shape index: {}]
  %s8 = sld [smem:[#allocation0]]
  $region69: #{gdn_autoencoder_forward.1} parent=0
    _
  %s10 = ssub.s32 1, %s8
  %s11 = scalar_select 0, %s10, %s8
  loop: start=0, step=1, limit=5
  $region2: #{gdn_autoencoder_forward.1} parent=0 // loop_pre_header
    _
  $region3: #{gdn_autoencoder_forward.1} parent=0 // loop_header
    %s13 = sphi 0, %s17
    %p14 = scmp.ge.s32.totalorder %s13, 5
    %s21 = sphi 0, %s21
    %s23 = sphi 0, %s21
    %s24 = sphi 0, %s23
    %s38 = sphi 0, %s24
    %s44 = sphi 0, %s46
    %s47 = sphi 0, %s44
    %s48 = sphi 0, %s47
    %s64 = sphi 0, %s48
    %s68 = sphi 0, %s68
    %s70 = sphi 0, %s68
    %s71 = sphi 0, %s70
    %s85 = sphi 0, %s71
    %s89 = sphi 0, %s89
    %s91 = sphi 0, %s89
    %s92 = sphi 0, %s91
    %s106 = sphi 0, %s92
    %s110 = sphi 0, %s110
    %s112 = sphi 0, %s110
    %s113 = sphi 0, %s112
    %s127 = sphi 0, %s113
    %s131 = sphi 0, %s131
    %s133 = sphi 0, %s131
    %s134 = sphi 0, %s133
    %s148 = sphi 0, %s134
    %s152 = sphi 0, %s152
    %s154 = sphi 0, %s152
    %s155 = sphi 0, %s154
    %s169 = sphi 0, %s155
    %s173 = sphi 0, %s173
    %s175 = sphi 0, %s173
    %s176 = sphi 0, %s175
    %s190 = sphi 0, %s176
  $region4: #{gdn_autoencoder_forward.1} parent=0 // loop_header_branch
    %16 = sbr.rel (%p14) target = $region8
  $region5: #{gdn_autoencoder_forward.1} parent=0 // loop_body
    %s18 = ssub.s32 %s13, 1
    %s19 = ssub.s32 %s13, 2
    %s20 = sadd.s32 %s13, 1
    %s22 = sadd.s32 %s21, 1
    %p25 = scmp.eq.s32.totalorder %s13, 2
    %p26 = scmp.ne.s32.totalorder %s21, %s23
    %p27 = scmp.eq.s32.totalorder %s13, 0
    %p28 = por %p26, %p27
    %p29 = scmp.ne.s32.totalorder %s21, %s23
    %p30 = scmp.eq.s32.totalorder %s18, 2
    %p31 = por %p29, %p30
    %p32 = scmp.ne.s32.totalorder %s23, %s24
    %p33 = scmp.eq.s32.totalorder %s18, 0
    %p34 = por %p32, %p33
    %p35 = scmp.ne.s32.totalorder %s23, %s24
    %p36 = scmp.eq.s32.totalorder %s19, 2
    %p37 = por %p35, %p36
    %p39 = scmp.ne.s32.totalorder %s24, %s38
    %p40 = scmp.eq.s32.totalorder %s19, 0
    %p41 = por %p39, %p40
    %s42 = ssub.s32 %s13, %s20
    %p43 = scmp.eq.s32.totalorder %s42, 0
    %s45 = sadd.s32 %s44, 1
    %s46 = scalar_select %p43, %s44, %s45
    %p49 = pneg %p43
    %p50 = scmp.eq.s32.totalorder %s13, 2
    %p51 = por %p49, %p50
    %p52 = scmp.ne.s32.totalorder %s44, %s47
    %p53 = scmp.eq.s32.totalorder %s13, 0
    %p54 = por %p52, %p53
    %p55 = scmp.ne.s32.totalorder %s44, %s47
    %p56 = scmp.eq.s32.totalorder %s18, 2
    %p57 = por %p55, %p56
    %p58 = scmp.ne.s32.totalorder %s47, %s48
    %p59 = scmp.eq.s32.totalorder %s18, 0
    %p60 = por %p58, %p59
    %p61 = scmp.ne.s32.totalorder %s47, %s48
    %p62 = scmp.eq.s32.totalorder %s19, 2
    %p63 = por %p61, %p62
    %p65 = scmp.ne.s32.totalorder %s48, %s64
    %p66 = scmp.eq.s32.totalorder %s19, 0
    %p67 = por %p65, %p66
    %s69 = sadd.s32 %s68, 1
    %p72 = scmp.eq.s32.totalorder %s13, 2
    %p73 = scmp.ne.s32.totalorder %s68, %s70
    %p74 = scmp.eq.s32.totalorder %s13, 0
    %p75 = por %p73, %p74
    %p76 = scmp.ne.s32.totalorder %s68, %s70
    %p77 = scmp.eq.s32.totalorder %s18, 2
    %p78 = por %p76, %p77
    %p79 = scmp.ne.s32.totalorder %s70, %s71
    %p80 = scmp.eq.s32.totalorder %s18, 0
    %p81 = por %p79, %p80
    %p82 = scmp.ne.s32.totalorder %s70, %s71
    %p83 = scmp.eq.s32.totalorder %s19, 2
    %p84 = por %p82, %p83
    %p86 = scmp.ne.s32.totalorder %s71, %s85
    %p87 = scmp.eq.s32.totalorder %s19, 0
    %p88 = por %p86, %p87
    %s90 = sadd.s32 %s89, 1
    %p93 = scmp.eq.s32.totalorder %s13, 2
    %p94 = scmp.ne.s32.totalorder %s89, %s91
    %p95 = scmp.eq.s32.totalorder %s13, 0
    %p96 = por %p94, %p95
    %p97 = scmp.ne.s32.totalorder %s89, %s91
    %p98 = scmp.eq.s32.totalorder %s18, 2
    %p99 = por %p97, %p98
    %p100 = scmp.ne.s32.totalorder %s91, %s92
    %p101 = scmp.eq.s32.totalorder %s18, 0
    %p102 = por %p100, %p101
    %p103 = scmp.ne.s32.totalorder %s91, %s92
    %p104 = scmp.eq.s32.totalorder %s19, 2
    %p105 = por %p103, %p104
    %p107 = scmp.ne.s32.totalorder %s92, %s106
    %p108 = scmp.eq.s32.totalorder %s19, 0
    %p109 = por %p107, %p108
    %s111 = sadd.s32 %s110, 1
    %p114 = scmp.eq.s32.totalorder %s13, 2
    %p115 = scmp.ne.s32.totalorder %s110, %s112
    %p116 = scmp.eq.s32.totalorder %s13, 0
    %p117 = por %p115, %p116
    %p118 = scmp.ne.s32.totalorder %s110, %s112
    %p119 = scmp.eq.s32.totalorder %s18, 2
    %p120 = por %p118, %p119
    %p121 = scmp.ne.s32.totalorder %s112, %s113
    %p122 = scmp.eq.s32.totalorder %s18, 0
    %p123 = por %p121, %p122
    %p124 = scmp.ne.s32.totalorder %s112, %s113
    %p125 = scmp.eq.s32.totalorder %s19, 2
    %p126 = por %p124, %p125
    %p128 = scmp.ne.s32.totalorder %s113, %s127
    %p129 = scmp.eq.s32.totalorder %s19, 0
    %p130 = por %p128, %p129
    %s132 = sadd.s32 %s131, 1
    %p135 = scmp.eq.s32.totalorder %s13, 2
    %p136 = scmp.ne.s32.totalorder %s131, %s133
    %p137 = scmp.eq.s32.totalorder %s13, 0
    %p138 = por %p136, %p137
    %p139 = scmp.ne.s32.totalorder %s131, %s133
    %p140 = scmp.eq.s32.totalorder %s18, 2
    %p141 = por %p139, %p140
    %p142 = scmp.ne.s32.totalorder %s133, %s134
    %p143 = scmp.eq.s32.totalorder %s18, 0
    %p144 = por %p142, %p143
    %p145 = scmp.ne.s32.totalorder %s133, %s134
    %p146 = scmp.eq.s32.totalorder %s19, 2
    %p147 = por %p145, %p146
    %p149 = scmp.ne.s32.totalorder %s134, %s148
    %p150 = scmp.eq.s32.totalorder %s19, 0
    %p151 = por %p149, %p150
    %s153 = sadd.s32 %s152, 1
    %p156 = scmp.eq.s32.totalorder %s13, 2
    %p157 = scmp.ne.s32.totalorder %s152, %s154
    %p158 = scmp.eq.s32.totalorder %s13, 0
    %p159 = por %p157, %p158
    %p160 = scmp.ne.s32.totalorder %s152, %s154
    %p161 = scmp.eq.s32.totalorder %s18, 2
    %p162 = por %p160, %p161
    %p163 = scmp.ne.s32.totalorder %s154, %s155
    %p164 = scmp.eq.s32.totalorder %s18, 0
    %p165 = por %p163, %p164
    %p166 = scmp.ne.s32.totalorder %s154, %s155
    %p167 = scmp.eq.s32.totalorder %s19, 2
    %p168 = por %p166, %p167
    %p170 = scmp.ne.s32.totalorder %s155, %s169
    %p171 = scmp.eq.s32.totalorder %s19, 0
    %p172 = por %p170, %p171
    %s174 = sadd.s32 %s173, 1
    %p177 = scmp.eq.s32.totalorder %s13, 2
    %p178 = scmp.ne.s32.totalorder %s173, %s175
    %p179 = scmp.eq.s32.totalorder %s13, 0
    %p180 = por %p178, %p179
    %p181 = scmp.ne.s32.totalorder %s173, %s175
    %p182 = scmp.eq.s32.totalorder %s18, 2
    %p183 = por %p181, %p182
    %p184 = scmp.ne.s32.totalorder %s175, %s176
    %p185 = scmp.eq.s32.totalorder %s18, 0
    %p186 = por %p184, %p185
    %p187 = scmp.ne.s32.totalorder %s175, %s176
    %p188 = scmp.eq.s32.totalorder %s19, 2
    %p189 = por %p187, %p188
    %p191 = scmp.ne.s32.totalorder %s176, %s190
    %p192 = scmp.eq.s32.totalorder %s19, 0
    %p193 = por %p191, %p192
    %p194 = scmp.le.s32.totalorder 1, %s13
    %p195 = scmp.lt.s32.totalorder %s13, 4
    %p196 = pnand %p194, %p195
    %p197 = pneg %p196
    // Predicated region
    $region9: #{gdn_autoencoder_forward.1} parent=5 // pred_check
      _
    $region10: #{gdn_autoencoder_forward.1} parent=5 // pred_check_branch
      %199 = sbr.rel (%p196) target = $region12
    $region11: #{gdn_autoencoder_forward.1} parent=5 // pred_region
      %s200 = ssub.s32 %s13, 1
      // Predicated region
      $region13: #{gdn_autoencoder_forward.1} parent=11 // pred_check
        %p201 = pneg %p34
      $region14: #{gdn_autoencoder_forward.1} parent=11 // pred_check_branch
        %203 = sbr.rel (%p201) target = $region16
      $region15: #{gdn_autoencoder_forward.1} parent=11 // pred_region
        _
      $region16: #{gdn_autoencoder_forward.1} parent=11 // pred_fallthru
        _
      // Predicated region
      $region17: #{gdn_autoencoder_forward.1} parent=11 // pred_check
        %p204 = pneg %p81
      $region18: #{gdn_autoencoder_forward.1} parent=11 // pred_check_branch
        %206 = sbr.rel (%p204) target = $region20
      $region19: #{gdn_autoencoder_forward.1} parent=11 // pred_region
        _
      $region20: #{gdn_autoencoder_forward.1} parent=11 // pred_fallthru
        _
      // Predicated region
      $region21: #{gdn_autoencoder_forward.1} parent=11 // pred_check
        %p207 = pneg %p102
      $region22: #{gdn_autoencoder_forward.1} parent=11 // pred_check_branch
        %209 = sbr.rel (%p207) target = $region24
      $region23: #{gdn_autoencoder_forward.1} parent=11 // pred_region
        _
      $region24: #{gdn_autoencoder_forward.1} parent=11 // pred_fallthru
        _
      // Predicated region
      $region25: #{gdn_autoencoder_forward.1} parent=11 // pred_check
        %p210 = pneg %p123
      $region26: #{gdn_autoencoder_forward.1} parent=11 // pred_check_branch
        %212 = sbr.rel (%p210) target = $region28
      $region27: #{gdn_autoencoder_forward.1} parent=11 // pred_region
        _
      $region28: #{gdn_autoencoder_forward.1} parent=11 // pred_fallthru
        _
      // Predicated region
      $region29: #{gdn_autoencoder_forward.1} parent=11 // pred_check
        %p213 = pneg %p144
      $region30: #{gdn_autoencoder_forward.1} parent=11 // pred_check_branch
        %215 = sbr.rel (%p213) target = $region32
      $region31: #{gdn_autoencoder_forward.1} parent=11 // pred_region
        _
      $region32: #{gdn_autoencoder_forward.1} parent=11 // pred_fallthru
        _
      // Predicated region
      $region33: #{gdn_autoencoder_forward.1} parent=11 // pred_check
        %p216 = pneg %p165
      $region34: #{gdn_autoencoder_forward.1} parent=11 // pred_check_branch
        %218 = sbr.rel (%p216) target = $region36
      $region35: #{gdn_autoencoder_forward.1} parent=11 // pred_region
        _
      $region36: #{gdn_autoencoder_forward.1} parent=11 // pred_fallthru
        _
    $region12: #{gdn_autoencoder_forward.1} parent=5 // pred_fallthru
      _
    %p219 = scmp.lt.s32.totalorder %s13, 3
    // Predicated region
    $region37: #{gdn_autoencoder_forward.1} parent=5 // pred_check
      %p220 = pneg %p219
    $region38: #{gdn_autoencoder_forward.1} parent=5 // pred_check_branch
      %222 = sbr.rel (%p220) target = $region40
    $region39: #{gdn_autoencoder_forward.1} parent=5 // pred_region
      // Predicated region
      $region41: #{gdn_autoencoder_forward.1} parent=39 // pred_check
        %p223 = pneg %p54
      $region42: #{gdn_autoencoder_forward.1} parent=39 // pred_check_branch
        %225 = sbr.rel (%p223) target = $region44
      $region43: #{gdn_autoencoder_forward.1} parent=39 // pred_region
        %p226 = scmp.lt.s32.totalorder %s13, 2
        %s227 = scalar_select %p226, %s13, 2
        %s228 = smul.addr %s227, 4
        %s229 = smul.addr %s228, 4
        %s230 = scalar_lea.vmem %s1, %s229
      $region44: #{gdn_autoencoder_forward.1} parent=39 // pred_fallthru
        _
    $region40: #{gdn_autoencoder_forward.1} parent=5 // pred_fallthru
      _
    %p231 = scmp.le.s32.totalorder 1, %s13
    %p232 = scmp.lt.s32.totalorder %s13, 4
    %p233 = pnand %p231, %p232
    %p234 = pneg %p233
    // Predicated region
    $region45: #{gdn_autoencoder_forward.1} parent=5 // pred_check
      _
    $region46: #{gdn_autoencoder_forward.1} parent=5 // pred_check_branch
      %236 = sbr.rel (%p233) target = $region48
    $region47: #{gdn_autoencoder_forward.1} parent=5 // pred_region
      %s237 = ssub.s32 %s13, 1
      %p238 = pneg %p34
      %p239 = pneg %p31
      %p240 = scmp.lt.s32.totalorder %s18, 2
      %s241 = scalar_select %p240, %s18, 2
      %s242 = smul.addr %s241, 4
      %s243 = smul.addr %s242, 4
      %s244 = scalar_lea.vmem %s1, %s243
      %p245 = pneg %p60
      %p246 = pneg %p57
      %p247 = pneg %p81
      %p248 = pneg %p78
      %p249 = pneg %p102
      %p250 = pneg %p99
      %p251 = pneg %p123
      %p252 = pneg %p120
      %p253 = pneg %p144
      %p254 = pneg %p141
      %p255 = pneg %p165
      %p256 = pneg %p162
      %p257 = pneg %p186
      %p258 = pneg %p183
      %p259 = scmp.lt.s32.totalorder %s18, 2
      %s260 = scalar_select %p259, %s18, 2
      %s261 = smul.addr %s260, 4
      %s262 = smul.addr %s261, 4
      %s263 = scalar_lea.vmem %s1, %s262
      %v265 = vld [vmem:[%s263] sm:$0xf]
      %v266 = vld [vmem:[%s263 + $0x4] sm:$0xf]
      %v267 = vld [vmem:[%s263 + $0x8] sm:$0xf]
      %v268 = vld [vmem:[%s263 + $0xc] sm:$0xf]
      %v269 = vunpack.c.l.bf16 %v265
      %v270 = vunpack.c.l.bf16 %v266
      %v271 = vunpack.c.l.bf16 %v267
      %v272 = vunpack.c.l.bf16 %v268
      %v273 = vld [vmem:[%s0] sm:$0xff]
      %v274 = vld [vmem:[%s0 + $0x8] sm:$0xff]
      %v275 = vld [vmem:[%s0 + $0x10] sm:$0xff]
      %v276 = vld [vmem:[%s0 + $0x18] sm:$0xff]
      %v277 = vld [vmem:[%s2] sm:$0xff]
      %v278 = vld [vmem:[%s2 + $0x8] sm:$0xff]
      %v279 = vld [vmem:[%s2 + $0x10] sm:$0xff]
      %v280 = vld [vmem:[%s2 + $0x18] sm:$0xff]
      %v281 = vld [vmem:[%s2 + $0x20] sm:$0xff]
      %v282 = vld [vmem:[%s2 + $0x28] sm:$0xff]
      %v283 = vld [vmem:[%s2 + $0x30] sm:$0xff]
      %v284 = vld [vmem:[%s2 + $0x38] sm:$0xff]
      %v285 = vld [vmem:[%s2 + $0x40] sm:$0xff]
      %v286 = vld [vmem:[%s2 + $0x48] sm:$0xff]
      %v287 = vld [vmem:[%s2 + $0x50] sm:$0xff]
      %v288 = vld [vmem:[%s2 + $0x58] sm:$0xff]
      %v289 = vld [vmem:[%s2 + $0x60] sm:$0xff]
      %v290 = vld [vmem:[%s2 + $0x68] sm:$0xff]
      %v291 = vld [vmem:[%s2 + $0x70] sm:$0xff]
      %v292 = vld [vmem:[%s2 + $0x78] sm:$0xff]
      %v293 = vld [vmem:[%s2 + $0x80] sm:$0xff]
      %v294 = vld [vmem:[%s2 + $0x88] sm:$0xff]
      %v295 = vld [vmem:[%s2 + $0x90] sm:$0xff]
      %v296 = vld [vmem:[%s2 + $0x98] sm:$0xff]
      %v297 = vld [vmem:[%s2 + $0xa0] sm:$0xff]
      %v298 = vld [vmem:[%s2 + $0xa8] sm:$0xff]
      %v299 = vld [vmem:[%s2 + $0xb0] sm:$0xff]
      %v300 = vld [vmem:[%s2 + $0xb8] sm:$0xff]
      %v301 = vld [vmem:[%s2 + $0xc0] sm:$0xff]
      %v302 = vld [vmem:[%s2 + $0xc8] sm:$0xff]
      %v303 = vld [vmem:[%s2 + $0xd0] sm:$0xff]
      %v304 = vld [vmem:[%s2 + $0xd8] sm:$0xff]
      %v305 = vld [vmem:[%s2 + $0xe0] sm:$0xff]
      %v306 = vld [vmem:[%s2 + $0xe8] sm:$0xff]
      %v307 = vld [vmem:[%s2 + $0xf0] sm:$0xff]
      %v308 = vld [vmem:[%s2 + $0xf8] sm:$0xff]
      %309 = vmatpush.msra.mxu0 %v307
      %310 = vmatpush.msra.mxu0 %v305
      %311 = vmatpush.msra.mxu0 %v303
      %312 = vmatpush.msra.mxu0 %v301
      %313 = vmatpush.msra.mxu0 %v299
      %314 = vmatpush.msra.mxu0 %v297
      %315 = vmatpush.msra.mxu0 %v295
      %316 = vmatpush.msra.mxu0 %v293
      %317 = vmatpush.msra.mxu0 %v291
      %318 = vmatpush.msra.mxu0 %v289
      %319 = vmatpush.msra.mxu0 %v287
      %320 = vmatpush.msra.mxu0 %v285
      %321 = vmatpush.msra.mxu0 %v283
      %322 = vmatpush.msra.mxu0 %v281
      %323 = vmatpush.msra.mxu0 %v279
      %324 = vmatpush.msra.mxu0 %v277
      %325 = vmatmul.f32.gmra.mxu0 %v273
      %v326 = vpop.f32.mrf.mxu0
      %v327 = vadd.f32 0.0, %v326
      %328 = vmatmul.f32.gmra.mxu0 %v274
      %v329 = vpop.f32.mrf.mxu0
      %v330 = vadd.f32 0.0, %v329
      %331 = vmatmul.f32.gmra.mxu0 %v275
      %v332 = vpop.f32.mrf.mxu0
      %v333 = vadd.f32 0.0, %v332
      %334 = vmatmul.f32.gmra.mxu0 %v276
      %v335 = vpop.f32.mrf.mxu0
      %v336 = vadd.f32 0.0, %v335
      %337 = vdwg.mxu0
      %338 = vmatpush.msra.mxu0 %v308
      %339 = vmatpush.msra.mxu0 %v306
      %340 = vmatpush.msra.mxu0 %v304
      %341 = vmatpush.msra.mxu0 %v302
      %342 = vmatpush.msra.mxu0 %v300
      %343 = vmatpush.msra.mxu0 %v298
      %344 = vmatpush.msra.mxu0 %v296
      %345 = vmatpush.msra.mxu0 %v294
      %346 = vmatpush.msra.mxu0 %v292
      %347 = vmatpush.msra.mxu0 %v290
      %348 = vmatpush.msra.mxu0 %v288
      %349 = vmatpush.msra.mxu0 %v286
      %350 = vmatpush.msra.mxu0 %v284
      %351 = vmatpush.msra.mxu0 %v282
      %352 = vmatpush.msra.mxu0 %v280
      %353 = vmatpush.msra.mxu0 %v278
      %354 = vmatmul.f32.gmra.mxu0 %v273
      %v355 = vpop.f32.mrf.mxu0
      %v356 = vadd.f32 0.0, %v355
      %357 = vmatmul.f32.gmra.mxu0 %v274
      %v358 = vpop.f32.mrf.mxu0
      %v359 = vadd.f32 0.0, %v358
      %360 = vmatmul.f32.gmra.mxu0 %v275
      %v361 = vpop.f32.mrf.mxu0
      %v362 = vadd.f32 0.0, %v361
      %363 = vmatmul.f32.gmra.mxu0 %v276
      %v364 = vpop.f32.mrf.mxu0
      %v365 = vadd.f32 0.0, %v364
      %366 = vdwg.mxu0
      %v367 = vlaneseq
      %v368 = vand.u32 %v367, 127
      %vm369 = vcmp.eq.s32.totalorder %v368, 32
      %v370 = vsel %vm369, 1.0, %v356
      %v371 = vsel %vm369, 1.0, %v359
      %v372 = vsel %vm369, 1.0, %v362
      %v373 = vsel %vm369, 1.0, %v365
      %v374 = vld [vmem:[%s3] sm:$0x1]
      %v376 = vperm.slane %v374, 0
      %v378 = vmul.f32 %v370, %v376
      %v379 = vmul.f32 %v371, %v376
      %v380 = vmul.f32 %v372, %v376
      %v381 = vmul.f32 %v373, %v376
      %382 = vadd.xlane.f32.xlu0 %v378
      %v383 = vpop.xlane.xlu0 %382
      %384 = vadd.xlane.f32.xlu0 %v379
      %v385 = vpop.xlane.xlu0 %384
      %386 = vadd.xlane.f32.xlu0 %v380
      %v387 = vpop.xlane.xlu0 %386
      %388 = vadd.xlane.f32.xlu0 %v381
      %v389 = vpop.xlane.xlu0 %388
      %390 = vmatpush.xpose.msra.mxu0 0.0
      %391 = vmatpush.xpose.msra.mxu0 0.0
      %392 = vmatpush.xpose.msra.mxu0 0.0
      %393 = vmatpush.xpose.msra.mxu0 0.0
      %394 = vmatpush.xpose.msra.mxu0 0.0
      %395 = vmatpush.xpose.msra.mxu0 0.0
      %396 = vmatpush.xpose.msra.mxu0 0.0
      %397 = vmatpush.xpose.msra.mxu0 0.0
      %398 = vmatpush.xpose.msra.mxu0 0.0
      %399 = vmatpush.xpose.msra.mxu0 0.0
      %400 = vmatpush.xpose.msra.mxu0 0.0
      %401 = vmatpush.xpose.msra.mxu0 0.0
      %402 = vmatpush.xpose.msra.mxu0 %v373
      %403 = vmatpush.xpose.msra.mxu0 %v372
      %404 = vmatpush.xpose.msra.mxu0 %v371
      %405 = vmatpush.xpose.msra.mxu0 %v370
      %406 = vmatmul.f32.gmra.mxu0 %v374
      %v407 = vpop.f32.mrf.mxu0
      %v408 = vadd.f32 0.0, %v407
      %409 = vdwg.mxu0
      %v410 = vperm.slane %v408, 0
      %v411 = vsub.f32 %v410, %v383
      %v412 = vsub.f32 %v410, %v385
      %v413 = vsub.f32 %v410, %v387
      %v414 = vsub.f32 %v410, %v389
      %v415 = vmul.f32 %v411, 0.01
      %v416 = vmul.f32 %v412, 0.01
      %v417 = vmul.f32 %v413, 0.01
      %v418 = vmul.f32 %v414, 0.01
      %v419 = vmax.f32 %v411, %v415
      %v420 = vmax.f32 %v412, %v416
      %v421 = vmax.f32 %v413, %v417
      %v422 = vmax.f32 %v414, %v418
      %v423 = vadd.f32 %v419, %v269
      %v424 = vadd.f32 %v420, %v270
      %v425 = vadd.f32 %v421, %v271
      %v426 = vadd.f32 %v422, %v272
      %vm427 = vcmask 261120
      %v428 = vsel %vm427, %v423, -inf
      %429 = vmax.xlane.f32.xlu0 %v428
      %v430 = vpop.xlane.xlu0 %429
      %v431 = vsel %vm427, %v424, -inf
      %432 = vmax.xlane.f32.xlu0 %v431
      %v433 = vpop.xlane.xlu0 %432
      %v434 = vsel %vm427, %v425, -inf
      %435 = vmax.xlane.f32.xlu0 %v434
      %v436 = vpop.xlane.xlu0 %435
      %v437 = vsel %vm427, %v426, -inf
      %438 = vmax.xlane.f32.xlu0 %v437
      %v439 = vpop.xlane.xlu0 %438
      %v440 = vsub.f32 %v423, %v430
      %v441 = vsub.f32 %v424, %v433
      %v442 = vsub.f32 %v425, %v436
      %v443 = vsub.f32 %v426, %v439
      %v444 = vmul.f32 %v440, 1.442695
      %v445 = vpow.pop %v444
      %v446 = vmul.f32 %v441, 1.442695
      %v447 = vpow.pop %v446
      %v448 = vmul.f32 %v442, 1.442695
      %v449 = vpow.pop %v448
      %v450 = vmul.f32 %v443, 1.442695
      %v451 = vpow.pop %v450
      %v452 = vpack.c.bf16 %v447, %v445
      %v453 = vpack.c.bf16 %v451, %v449
      %v454 = vpack.c.bf16 %v371, %v370
      %v455 = vpack.c.bf16 %v373, %v372
      %v457 = vsel %vm427, %v452, 0
      %v460 = vsel %vm427, %v453, 0
      %462 = vmatpush.bf16.msra.mxu0 0
      %463 = vmatpush.bf16.msra.mxu0 0
      %464 = vmatpush.bf16.msra.mxu0 0
      %465 = vmatpush.bf16.msra.mxu0 0
      %466 = vmatpush.bf16.msra.mxu0 0
      %467 = vmatpush.bf16.msra.mxu0 0
      %468 = vmatpush.bf16.msra.mxu0 %v455
      %469 = vmatpush.bf16.msra.mxu0 %v454
      %470 = vmatmul.bf16.gmra.mxu0 %v457
      %v471 = vpop.f32.mrf.mxu0
      %v472 = vadd.f32 0.0, %v471
      %v473 = vpop.f32.mrf.mxu0
      %v474 = vadd.f32 0.0, %v473
      %475 = vmatmul.bf16.gmra.mxu0 %v460
      %v476 = vpop.f32.mrf.mxu0
      %v477 = vadd.f32 0.0, %v476
      %v478 = vpop.f32.mrf.mxu0
      %v479 = vadd.f32 0.0, %v478
      %480 = vdwg.mxu0
      %v481 = vrcp.pop %v472
      %v482 = vmul.f32 %v472, %v481
      %v483 = vsub.f32 1.0, %v482
      %v484 = vmul.f32 %v481, %v483
      %v485 = vadd.f32 %v481, %v484
      %vm486 = vweird.f32 %v472
      %vm487 = vweird.f32 %v481
      %vm488 = vmor %vm486, %vm487
      %v489 = vsel %vm488, %v481, %v485
      %v490 = vand.u32 2147483647, %v472
      %vm491 = vcmp.eq.f32.partialorder %v490, 8.507059e+37
      %v492 = vand.u32 %v472, 2147483648
      %v493 = vor.u32 1.1754944e-38, %v492
      %v494 = vsel %vm491, %v493, %v489
      %v495 = vrcp.pop %v474
      %v496 = vmul.f32 %v474, %v495
      %v497 = vsub.f32 1.0, %v496
      %v498 = vmul.f32 %v495, %v497
      %v499 = vadd.f32 %v495, %v498
      %vm500 = vweird.f32 %v474
      %vm501 = vweird.f32 %v495
      %vm502 = vmor %vm500, %vm501
      %v503 = vsel %vm502, %v495, %v499
      %v504 = vand.u32 2147483647, %v474
      %vm505 = vcmp.eq.f32.partialorder %v504, 8.507059e+37
      %v506 = vand.u32 %v474, 2147483648
      %v507 = vor.u32 1.1754944e-38, %v506
      %v508 = vsel %vm505, %v507, %v503
      %v509 = vrcp.pop %v477
      %v510 = vmul.f32 %v477, %v509
      %v511 = vsub.f32 1.0, %v510
      %v512 = vmul.f32 %v509, %v511
      %v513 = vadd.f32 %v509, %v512
      %vm514 = vweird.f32 %v477
      %vm515 = vweird.f32 %v509
      %vm516 = vmor %vm514, %vm515
      %v517 = vsel %vm516, %v509, %v513
      %v518 = vand.u32 2147483647, %v477
      %vm519 = vcmp.eq.f32.partialorder %v518, 8.507059e+37
      %v520 = vand.u32 %v477, 2147483648
      %v521 = vor.u32 1.1754944e-38, %v520
      %v522 = vsel %vm519, %v521, %v517
      %v523 = vrcp.pop %v479
      %v524 = vmul.f32 %v479, %v523
      %v525 = vsub.f32 1.0, %v524
      %v526 = vmul.f32 %v523, %v525
      %v527 = vadd.f32 %v523, %v526
      %vm528 = vweird.f32 %v479
      %vm529 = vweird.f32 %v523
      %vm530 = vmor %vm528, %vm529
      %v531 = vsel %vm530, %v523, %v527
      %v532 = vand.u32 2147483647, %v479
      %vm533 = vcmp.eq.f32.partialorder %v532, 8.507059e+37
      %v534 = vand.u32 %v479, 2147483648
      %v535 = vor.u32 1.1754944e-38, %v534
      %v536 = vsel %vm533, %v535, %v531
      %538 = vset.pattern.permute.xlu0 32
      %539 = vperm.xlu0 %538, %v494
      %v540 = vpop.permute.xlu0 %539
      %543 = vset.pattern.permute.xlu0 32
      %544 = vperm.xlu0 %543, %v508
      %v545 = vpop.permute.xlu0 %544
      %548 = vset.pattern.permute.xlu0 32
      %549 = vperm.xlu0 %548, %v522
      %v550 = vpop.permute.xlu0 %549
      %553 = vset.pattern.permute.xlu0 32
      %554 = vperm.xlu0 %553, %v536
      %v555 = vpop.permute.xlu0 %554
      %v557 = vmul.f32 %v472, %v540
      %v558 = vmul.f32 %v474, %v545
      %v559 = vmul.f32 %v477, %v550
      %v560 = vmul.f32 %v479, %v555
      %v561 = vadd.f32 %v327, %v557
      %v562 = vadd.f32 %v330, %v558
      %v563 = vadd.f32 %v333, %v559
      %v564 = vadd.f32 %v336, %v560
      %v565 = vsub.f32 %v561, %v370
      %v566 = vsub.f32 %v562, %v371
      %v567 = vsub.f32 %v563, %v372
      %v568 = vsub.f32 %v564, %v373
      %vm569 = vcmp.gt.f32.partialorder %v565, 0.0
      %vm570 = vcmp.gt.f32.partialorder %v566, 0.0
      %vm571 = vcmp.gt.f32.partialorder %v567, 0.0
      %vm572 = vcmp.gt.f32.partialorder %v568, 0.0
      %v573 = vmin.f32 %v565, 0.0
      %v574 = vmin.f32 %v566, 0.0
      %v575 = vmin.f32 %v567, 0.0
      %v576 = vmin.f32 %v568, 0.0
      %v577 = vmul.f32 %v573, 1.442695
      %v578 = vpow.pop %v577
      %v579 = vmul.f32 %v574, 1.442695
      %v580 = vpow.pop %v579
      %v581 = vmul.f32 %v575, 1.442695
      %v582 = vpow.pop %v581
      %v583 = vmul.f32 %v576, 1.442695
      %v584 = vpow.pop %v583
      %v585 = vsub.f32 %v578, 1.0
      %v586 = vsub.f32 %v580, 1.0
      %v587 = vsub.f32 %v582, 1.0
      %v588 = vsub.f32 %v584, 1.0
      %v589 = vsel %vm569, %v565, %v585
      %v590 = vsel %vm570, %v566, %v586
      %v591 = vsel %vm571, %v567, %v587
      %v592 = vsel %vm572, %v568, %v588
      %v593 = vld [vmem:[%s4] sm:$0x1]
      %v595 = vperm.slane %v593, 0
      %v597 = vmul.f32 %v589, %v595
      %v598 = vmul.f32 %v590, %v595
      %v599 = vmul.f32 %v591, %v595
      %v600 = vmul.f32 %v592, %v595
      %601 = vadd.xlane.f32.xlu0 %v597
      %v602 = vpop.xlane.xlu0 %601
      %603 = vadd.xlane.f32.xlu0 %v598
      %v604 = vpop.xlane.xlu0 %603
      %605 = vadd.xlane.f32.xlu0 %v599
      %v606 = vpop.xlane.xlu0 %605
      %607 = vadd.xlane.f32.xlu0 %v600
      %v608 = vpop.xlane.xlu0 %607
      %v609 = vmul.f32 %v602, 0.01
      %v610 = vmul.f32 %v604, 0.01
      %v611 = vmul.f32 %v606, 0.01
      %v612 = vmul.f32 %v608, 0.01
      %v613 = vmax.f32 %v602, %v609
      %v614 = vmax.f32 %v604, %v610
      %v615 = vmax.f32 %v606, %v611
      %v616 = vmax.f32 %v608, %v612
      %p617 = scmp.eq.s32.totalorder %s18, 0
      // Predicated region
      $region49: #{gdn_autoencoder_forward.1} parent=47 // pred_check
        %p618 = pneg %p617
      $region50: #{gdn_autoencoder_forward.1} parent=47 // pred_check_branch
        %620 = sbr.rel (%p618) target = $region52
      $region51: #{gdn_autoencoder_forward.1} parent=47 // pred_region
        %vm621 = vcmask 7168
        %622 = vst.msk [vmem:[#allocation2] sm:$0xff] %vm621, -1e+30
        %623 = vst.msk [vmem:[#allocation2 + $0x8] sm:$0xff] %vm621, -1e+30
        %624 = vst.msk [vmem:[#allocation2 + $0x10] sm:$0xff] %vm621, -1e+30
        %625 = vst.msk [vmem:[#allocation2 + $0x18] sm:$0xff] %vm621, -1e+30
        %626 = vst.msk [vmem:[#allocation3] sm:$0xff] %vm621, 0.0
        %627 = vst.msk [vmem:[#allocation3 + $0x8] sm:$0xff] %vm621, 0.0
        %628 = vst.msk [vmem:[#allocation3 + $0x10] sm:$0xff] %vm621, 0.0
        %629 = vst.msk [vmem:[#allocation3 + $0x18] sm:$0xff] %vm621, 0.0
        %630 = vst [vmem:[#allocation4] sm:$0xff] 0.0
        %631 = vst [vmem:[#allocation4 + $0x8] sm:$0xff] 0.0
        %632 = vst [vmem:[#allocation4 + $0x10] sm:$0xff] 0.0
        %633 = vst [vmem:[#allocation4 + $0x18] sm:$0xff] 0.0
      $region52: #{gdn_autoencoder_forward.1} parent=47 // pred_fallthru
        _
      %v634 = vld [vmem:[#allocation2] sm:$0xff]
      %v635 = vld [vmem:[#allocation2 + $0x8] sm:$0xff]
      %v636 = vld [vmem:[#allocation2 + $0x10] sm:$0xff]
      %v637 = vld [vmem:[#allocation2 + $0x18] sm:$0xff]
      %v638 = vmax.f32 %v634, %v613
      %v639 = vmax.f32 %v635, %v614
      %v640 = vmax.f32 %v636, %v615
      %v641 = vmax.f32 %v637, %v616
      %v642 = vsub.f32 %v634, %v638
      %v643 = vsub.f32 %v635, %v639
      %v644 = vsub.f32 %v636, %v640
      %v645 = vsub.f32 %v637, %v641
      %v646 = vmul.f32 %v642, 1.442695
      %v647 = vpow.pop %v646
      %v648 = vmul.f32 %v643, 1.442695
      %v649 = vpow.pop %v648
      %v650 = vmul.f32 %v644, 1.442695
      %v651 = vpow.pop %v650
      %v652 = vmul.f32 %v645, 1.442695
      %v653 = vpow.pop %v652
      %v654 = vsub.f32 %v613, %v638
      %v655 = vsub.f32 %v614, %v639
      %v656 = vsub.f32 %v615, %v640
      %v657 = vsub.f32 %v616, %v641
      %v658 = vmul.f32 %v654, 1.442695
      %v659 = vpow.pop %v658
      %v660 = vmul.f32 %v655, 1.442695
      %v661 = vpow.pop %v660
      %v662 = vmul.f32 %v656, 1.442695
      %v663 = vpow.pop %v662
      %v664 = vmul.f32 %v657, 1.442695
      %v665 = vpow.pop %v664
      %v666 = vld [vmem:[#allocation3] sm:$0xff]
      %v667 = vld [vmem:[#allocation3 + $0x8] sm:$0xff]
      %v668 = vld [vmem:[#allocation3 + $0x10] sm:$0xff]
      %v669 = vld [vmem:[#allocation3 + $0x18] sm:$0xff]
      %v670 = vmul.f32 %v647, %v666
      %v671 = vmul.f32 %v649, %v667
      %v672 = vmul.f32 %v651, %v668
      %v673 = vmul.f32 %v653, %v669
      %v674 = vadd.f32 %v670, %v659
      %v675 = vadd.f32 %v671, %v661
      %v676 = vadd.f32 %v672, %v663
      %v677 = vadd.f32 %v673, %v665
      %vm678 = vcmask 7168
      %679 = vst.msk [vmem:[#allocation3] sm:$0xff] %vm678, %v674
      %680 = vst.msk [vmem:[#allocation3 + $0x8] sm:$0xff] %vm678, %v675
      %681 = vst.msk [vmem:[#allocation3 + $0x10] sm:$0xff] %vm678, %v676
      %682 = vst.msk [vmem:[#allocation3 + $0x18] sm:$0xff] %vm678, %v677
      %v683 = vld [vmem:[#allocation4] sm:$0xff]
      %v684 = vld [vmem:[#allocation4 + $0x8] sm:$0xff]
      %v685 = vld [vmem:[#allocation4 + $0x10] sm:$0xff]
      %v686 = vld [vmem:[#allocation4 + $0x18] sm:$0xff]
      %688 = vset.pattern.permute.xlu0 0
      %689 = vperm.xlu0 %688, %v647
      %v690 = vpop.permute.xlu0 %689
      %693 = vset.pattern.permute.xlu0 0
      %694 = vperm.xlu0 %693, %v649
      %v695 = vpop.permute.xlu0 %694
      %698 = vset.pattern.permute.xlu0 0
      %699 = vperm.xlu0 %698, %v651
      %v700 = vpop.permute.xlu0 %699
      %703 = vset.pattern.permute.xlu0 0
      %704 = vperm.xlu0 %703, %v653
      %v705 = vpop.permute.xlu0 %704
      %v707 = vmul.f32 %v690, %v683
      %v708 = vmul.f32 %v695, %v684
      %v709 = vmul.f32 %v700, %v685
      %v710 = vmul.f32 %v705, %v686
      %712 = vset.pattern.permute.xlu0 0
      %713 = vperm.xlu0 %712, %v659
      %v714 = vpop.permute.xlu0 %713
      %717 = vset.pattern.permute.xlu0 0
      %718 = vperm.xlu0 %717, %v661
      %v719 = vpop.permute.xlu0 %718
      %722 = vset.pattern.permute.xlu0 0
      %723 = vperm.xlu0 %722, %v663
      %v724 = vpop.permute.xlu0 %723
      %727 = vset.pattern.permute.xlu0 0
      %728 = vperm.xlu0 %727, %v665
      %v729 = vpop.permute.xlu0 %728
      %v731 = vmul.f32 %v714, %v589
      %v732 = vmul.f32 %v719, %v590
      %v733 = vmul.f32 %v724, %v591
      %v734 = vmul.f32 %v729, %v592
      %v735 = vadd.f32 %v707, %v731
      %v736 = vadd.f32 %v708, %v732
      %v737 = vadd.f32 %v709, %v733
      %v738 = vadd.f32 %v710, %v734
      %739 = vst [vmem:[#allocation4] sm:$0xff] %v735
      %740 = vst [vmem:[#allocation4 + $0x8] sm:$0xff] %v736
      %741 = vst [vmem:[#allocation4 + $0x10] sm:$0xff] %v737
      %742 = vst [vmem:[#allocation4 + $0x18] sm:$0xff] %v738
      %743 = vst.msk [vmem:[#allocation2] sm:$0xff] %vm678, %v638
      %744 = vst.msk [vmem:[#allocation2 + $0x8] sm:$0xff] %vm678, %v639
      %745 = vst.msk [vmem:[#allocation2 + $0x10] sm:$0xff] %vm678, %v640
      %746 = vst.msk [vmem:[#allocation2 + $0x18] sm:$0xff] %vm678, %v641
      %p747 = scmp.eq.s32.totalorder %s18, 2
      // Predicated region
      $region53: #{gdn_autoencoder_forward.1} parent=47 // pred_check
        %p748 = pneg %p747
      $region54: #{gdn_autoencoder_forward.1} parent=47 // pred_check_branch
        %750 = sbr.rel (%p748) target = $region56
      $region55: #{gdn_autoencoder_forward.1} parent=47 // pred_region
        %v751 = vld [vmem:[#allocation4] sm:$0xff]
        %v752 = vld [vmem:[#allocation4 + $0x8] sm:$0xff]
        %v753 = vld [vmem:[#allocation4 + $0x10] sm:$0xff]
        %v754 = vld [vmem:[#allocation4 + $0x18] sm:$0xff]
        %v755 = vld [vmem:[#allocation3] sm:$0xff]
        %v756 = vld [vmem:[#allocation3 + $0x8] sm:$0xff]
        %v757 = vld [vmem:[#allocation3 + $0x10] sm:$0xff]
        %v758 = vld [vmem:[#allocation3 + $0x18] sm:$0xff]
        %v759 = vrcp.pop %v755
        %v760 = vmul.f32 %v755, %v759
        %v761 = vsub.f32 1.0, %v760
        %v762 = vmul.f32 %v759, %v761
        %v763 = vadd.f32 %v759, %v762
        %vm764 = vweird.f32 %v755
        %vm765 = vweird.f32 %v759
        %vm766 = vmor %vm764, %vm765
        %v767 = vsel %vm766, %v759, %v763
        %v768 = vand.u32 2147483647, %v755
        %vm769 = vcmp.eq.f32.partialorder %v768, 8.507059e+37
        %v770 = vand.u32 %v755, 2147483648
        %v771 = vor.u32 1.1754944e-38, %v770
        %v772 = vsel %vm769, %v771, %v767
        %v773 = vrcp.pop %v756
        %v774 = vmul.f32 %v756, %v773
        %v775 = vsub.f32 1.0, %v774
        %v776 = vmul.f32 %v773, %v775
        %v777 = vadd.f32 %v773, %v776
        %vm778 = vweird.f32 %v756
        %vm779 = vweird.f32 %v773
        %vm780 = vmor %vm778, %vm779
        %v781 = vsel %vm780, %v773, %v777
        %v782 = vand.u32 2147483647, %v756
        %vm783 = vcmp.eq.f32.partialorder %v782, 8.507059e+37
        %v784 = vand.u32 %v756, 2147483648
        %v785 = vor.u32 1.1754944e-38, %v784
        %v786 = vsel %vm783, %v785, %v781
        %v787 = vrcp.pop %v757
        %v788 = vmul.f32 %v757, %v787
        %v789 = vsub.f32 1.0, %v788
        %v790 = vmul.f32 %v787, %v789
        %v791 = vadd.f32 %v787, %v790
        %vm792 = vweird.f32 %v757
        %vm793 = vweird.f32 %v787
        %vm794 = vmor %vm792, %vm793
        %v795 = vsel %vm794, %v787, %v791
        %v796 = vand.u32 2147483647, %v757
        %vm797 = vcmp.eq.f32.partialorder %v796, 8.507059e+37
        %v798 = vand.u32 %v757, 2147483648
        %v799 = vor.u32 1.1754944e-38, %v798
        %v800 = vsel %vm797, %v799, %v795
        %v801 = vrcp.pop %v758
        %v802 = vmul.f32 %v758, %v801
        %v803 = vsub.f32 1.0, %v802
        %v804 = vmul.f32 %v801, %v803
        %v805 = vadd.f32 %v801, %v804
        %vm806 = vweird.f32 %v758
        %vm807 = vweird.f32 %v801
        %vm808 = vmor %vm806, %vm807
        %v809 = vsel %vm808, %v801, %v805
        %v810 = vand.u32 2147483647, %v758
        %vm811 = vcmp.eq.f32.partialorder %v810, 8.507059e+37
        %v812 = vand.u32 %v758, 2147483648
        %v813 = vor.u32 1.1754944e-38, %v812
        %v814 = vsel %vm811, %v813, %v809
        %816 = vset.pattern.permute.xlu0 0
        %817 = vperm.xlu0 %816, %v772
        %v818 = vpop.permute.xlu0 %817
        %821 = vset.pattern.permute.xlu0 0
        %822 = vperm.xlu0 %821, %v786
        %v823 = vpop.permute.xlu0 %822
        %826 = vset.pattern.permute.xlu0 0
        %827 = vperm.xlu0 %826, %v800
        %v828 = vpop.permute.xlu0 %827
        %831 = vset.pattern.permute.xlu0 0
        %832 = vperm.xlu0 %831, %v814
        %v833 = vpop.permute.xlu0 %832
        %v835 = vmul.f32 %v751, %v818
        %v836 = vmul.f32 %v752, %v823
        %v837 = vmul.f32 %v753, %v828
        %v838 = vmul.f32 %v754, %v833
        %v839 = vld [vmem:[%s5] sm:$0xff]
        %v840 = vld [vmem:[%s5 + $0x8] sm:$0xff]
        %v841 = vld [vmem:[%s5 + $0x10] sm:$0xff]
        %v842 = vld [vmem:[%s5 + $0x18] sm:$0xff]
        %v843 = vld [vmem:[%s5 + $0x20] sm:$0xff]
        %v844 = vld [vmem:[%s5 + $0x28] sm:$0xff]
        %v845 = vld [vmem:[%s5 + $0x30] sm:$0xff]
        %v846 = vld [vmem:[%s5 + $0x38] sm:$0xff]
        %v847 = vld [vmem:[%s5 + $0x40] sm:$0xff]
        %v848 = vld [vmem:[%s5 + $0x48] sm:$0xff]
        %v849 = vld [vmem:[%s5 + $0x50] sm:$0xff]
        %v850 = vld [vmem:[%s5 + $0x58] sm:$0xff]
        %v851 = vld [vmem:[%s5 + $0x60] sm:$0xff]
        %v852 = vld [vmem:[%s5 + $0x68] sm:$0xff]
        %v853 = vld [vmem:[%s5 + $0x70] sm:$0xff]
        %v854 = vld [vmem:[%s5 + $0x78] sm:$0xff]
        %v855 = vld [vmem:[%s5 + $0x80] sm:$0xff]
        %v856 = vld [vmem:[%s5 + $0x88] sm:$0xff]
        %v857 = vld [vmem:[%s5 + $0x90] sm:$0xff]
        %v858 = vld [vmem:[%s5 + $0x98] sm:$0xff]
        %v859 = vld [vmem:[%s5 + $0xa0] sm:$0xff]
        %v860 = vld [vmem:[%s5 + $0xa8] sm:$0xff]
        %v861 = vld [vmem:[%s5 + $0xb0] sm:$0xff]
        %v862 = vld [vmem:[%s5 + $0xb8] sm:$0xff]
        %v863 = vld [vmem:[%s5 + $0xc0] sm:$0xff]
        %v864 = vld [vmem:[%s5 + $0xc8] sm:$0xff]
        %v865 = vld [vmem:[%s5 + $0xd0] sm:$0xff]
        %v866 = vld [vmem:[%s5 + $0xd8] sm:$0xff]
        %v867 = vld [vmem:[%s5 + $0xe0] sm:$0xff]
        %v868 = vld [vmem:[%s5 + $0xe8] sm:$0xff]
        %v869 = vld [vmem:[%s5 + $0xf0] sm:$0xff]
        %v870 = vld [vmem:[%s5 + $0xf8] sm:$0xff]
        %871 = vmatpush.msra.mxu0 %v869
        %872 = vmatpush.msra.mxu0 %v867
        %873 = vmatpush.msra.mxu0 %v865
        %874 = vmatpush.msra.mxu0 %v863
        %875 = vmatpush.msra.mxu0 %v861
        %876 = vmatpush.msra.mxu0 %v859
        %877 = vmatpush.msra.mxu0 %v857
        %878 = vmatpush.msra.mxu0 %v855
        %879 = vmatpush.msra.mxu0 %v853
        %880 = vmatpush.msra.mxu0 %v851
        %881 = vmatpush.msra.mxu0 %v849
        %882 = vmatpush.msra.mxu0 %v847
        %883 = vmatpush.msra.mxu0 %v845
        %884 = vmatpush.msra.mxu0 %v843
        %885 = vmatpush.msra.mxu0 %v841
        %886 = vmatpush.msra.mxu0 %v839
        %887 = vmatmul.f32.gmra.mxu0 %v835
        %v888 = vpop.f32.mrf.mxu0
        %v889 = vadd.f32 0.0, %v888
        %890 = vmatmul.f32.gmra.mxu0 %v836
        %v891 = vpop.f32.mrf.mxu0
        %v892 = vadd.f32 0.0, %v891
        %893 = vmatmul.f32.gmra.mxu0 %v837
        %v894 = vpop.f32.mrf.mxu0
        %v895 = vadd.f32 0.0, %v894
        %896 = vmatmul.f32.gmra.mxu0 %v838
        %v897 = vpop.f32.mrf.mxu0
        %v898 = vadd.f32 0.0, %v897
        %899 = vdwg.mxu0
        %900 = vmatpush.msra.mxu0 %v870
        %901 = vmatpush.msra.mxu0 %v868
        %902 = vmatpush.msra.mxu0 %v866
        %903 = vmatpush.msra.mxu0 %v864
        %904 = vmatpush.msra.mxu0 %v862
        %905 = vmatpush.msra.mxu0 %v860
        %906 = vmatpush.msra.mxu0 %v858
        %907 = vmatpush.msra.mxu0 %v856
        %908 = vmatpush.msra.mxu0 %v854
        %909 = vmatpush.msra.mxu0 %v852
        %910 = vmatpush.msra.mxu0 %v850
        %911 = vmatpush.msra.mxu0 %v848
        %912 = vmatpush.msra.mxu0 %v846
        %913 = vmatpush.msra.mxu0 %v844
        %914 = vmatpush.msra.mxu0 %v842
        %915 = vmatpush.msra.mxu0 %v840
        %916 = vmatmul.f32.gmra.mxu0 %v835
        %v917 = vpop.f32.mrf.mxu0
        %v918 = vadd.f32 0.0, %v917
        %919 = vmatmul.f32.gmra.mxu0 %v836
        %v920 = vpop.f32.mrf.mxu0
        %v921 = vadd.f32 0.0, %v920
        %922 = vmatmul.f32.gmra.mxu0 %v837
        %v923 = vpop.f32.mrf.mxu0
        %v924 = vadd.f32 0.0, %v923
        %925 = vmatmul.f32.gmra.mxu0 %v838
        %v926 = vpop.f32.mrf.mxu0
        %v927 = vadd.f32 0.0, %v926
        %928 = vdwg.mxu0
        %vm929 = vcmp.eq.s32.totalorder %v368, 16
        %v930 = vsel %vm929, 1.0, %v918
        %v931 = vsel %vm929, 1.0, %v921
        %v932 = vsel %vm929, 1.0, %v924
        %v933 = vsel %vm929, 1.0, %v927
        %v934 = vld [vmem:[%s6] sm:$0x1]
        %v936 = vperm.slane %v934, 0
        %v938 = vmul.f32 %v930, %v936
        %v939 = vmul.f32 %v931, %v936
        %v940 = vmul.f32 %v932, %v936
        %v941 = vmul.f32 %v933, %v936
        %942 = vadd.xlane.f32.xlu0 %v938
        %v943 = vpop.xlane.xlu0 %942
        %944 = vadd.xlane.f32.xlu0 %v939
        %v945 = vpop.xlane.xlu0 %944
        %946 = vadd.xlane.f32.xlu0 %v940
        %v947 = vpop.xlane.xlu0 %946
        %948 = vadd.xlane.f32.xlu0 %v941
        %v949 = vpop.xlane.xlu0 %948
        %950 = vmatpush.xpose.msra.mxu0 0.0
        %951 = vmatpush.xpose.msra.mxu0 0.0
        %952 = vmatpush.xpose.msra.mxu0 0.0
        %953 = vmatpush.xpose.msra.mxu0 0.0
        %954 = vmatpush.xpose.msra.mxu0 0.0
        %955 = vmatpush.xpose.msra.mxu0 0.0
        %956 = vmatpush.xpose.msra.mxu0 0.0
        %957 = vmatpush.xpose.msra.mxu0 0.0
        %958 = vmatpush.xpose.msra.mxu0 0.0
        %959 = vmatpush.xpose.msra.mxu0 0.0
        %960 = vmatpush.xpose.msra.mxu0 0.0
        %961 = vmatpush.xpose.msra.mxu0 0.0
        %962 = vmatpush.xpose.msra.mxu0 %v933
        %963 = vmatpush.xpose.msra.mxu0 %v932
        %964 = vmatpush.xpose.msra.mxu0 %v931
        %965 = vmatpush.xpose.msra.mxu0 %v930
        %966 = vmatmul.f32.gmra.mxu0 %v934
        %v967 = vpop.f32.mrf.mxu0
        %v968 = vadd.f32 0.0, %v967
        %969 = vdwg.mxu0
        %v970 = vperm.slane %v968, 0
        %v971 = vsub.f32 %v970, %v943
        %v972 = vsub.f32 %v970, %v945
        %v973 = vsub.f32 %v970, %v947
        %v974 = vsub.f32 %v970, %v949
        %v975 = vmul.f32 %v971, 0.01
        %v976 = vmul.f32 %v972, 0.01
        %v977 = vmul.f32 %v973, 0.01
        %v978 = vmul.f32 %v974, 0.01
        %v979 = vmax.f32 %v971, %v975
        %v980 = vmax.f32 %v972, %v976
        %v981 = vmax.f32 %v973, %v977
        %v982 = vmax.f32 %v974, %v978
        %v983 = vadd.f32 %v979, %v269
        %v984 = vadd.f32 %v980, %v270
        %v985 = vadd.f32 %v981, %v271
        %v986 = vadd.f32 %v982, %v272
        %v987 = vsel %vm427, %v983, -inf
        %988 = vmax.xlane.f32.xlu0 %v987
        %v989 = vpop.xlane.xlu0 %988
        %v990 = vsel %vm427, %v984, -inf
        %991 = vmax.xlane.f32.xlu0 %v990
        %v992 = vpop.xlane.xlu0 %991
        %v993 = vsel %vm427, %v985, -inf
        %994 = vmax.xlane.f32.xlu0 %v993
        %v995 = vpop.xlane.xlu0 %994
        %v996 = vsel %vm427, %v986, -inf
        %997 = vmax.xlane.f32.xlu0 %v996
        %v998 = vpop.xlane.xlu0 %997
        %v999 = vsub.f32 %v983, %v989
        %v1000 = vsub.f32 %v984, %v992
        %v1001 = vsub.f32 %v985, %v995
        %v1002 = vsub.f32 %v986, %v998
        %v1003 = vmul.f32 %v999, 1.442695
        %v1004 = vpow.pop %v1003
        %v1005 = vmul.f32 %v1000, 1.442695
        %v1006 = vpow.pop %v1005
        %v1007 = vmul.f32 %v1001, 1.442695
        %v1008 = vpow.pop %v1007
        %v1009 = vmul.f32 %v1002, 1.442695
        %v1010 = vpow.pop %v1009
        %v1011 = vpack.c.bf16 %v1006, %v1004
        %v1012 = vpack.c.bf16 %v1010, %v1008
        %v1013 = vpack.c.bf16 %v931, %v930
        %v1014 = vpack.c.bf16 %v933, %v932
        %v1016 = vsel %vm427, %v1011, 0
        %v1019 = vsel %vm427, %v1012, 0
        %1021 = vmatpush.bf16.msra.mxu0 0
        %1022 = vmatpush.bf16.msra.mxu0 0
        %1023 = vmatpush.bf16.msra.mxu0 0
        %1024 = vmatpush.bf16.msra.mxu0 0
        %1025 = vmatpush.bf16.msra.mxu0 0
        %1026 = vmatpush.bf16.msra.mxu0 0
        %1027 = vmatpush.bf16.msra.mxu0 %v1014
        %1028 = vmatpush.bf16.msra.mxu0 %v1013
        %1029 = vmatmul.bf16.gmra.mxu0 %v1016
        %v1030 = vpop.f32.mrf.mxu0
        %v1031 = vadd.f32 0.0, %v1030
        %v1032 = vpop.f32.mrf.mxu0
        %v1033 = vadd.f32 0.0, %v1032
        %1034 = vmatmul.bf16.gmra.mxu0 %v1019
        %v1035 = vpop.f32.mrf.mxu0
        %v1036 = vadd.f32 0.0, %v1035
        %v1037 = vpop.f32.mrf.mxu0
        %v1038 = vadd.f32 0.0, %v1037
        %1039 = vdwg.mxu0
        %v1040 = vrcp.pop %v1031
        %v1041 = vmul.f32 %v1031, %v1040
        %v1042 = vsub.f32 1.0, %v1041
        %v1043 = vmul.f32 %v1040, %v1042
        %v1044 = vadd.f32 %v1040, %v1043
        %vm1045 = vweird.f32 %v1031
        %vm1046 = vweird.f32 %v1040
        %vm1047 = vmor %vm1045, %vm1046
        %v1048 = vsel %vm1047, %v1040, %v1044
        %v1049 = vand.u32 2147483647, %v1031
        %vm1050 = vcmp.eq.f32.partialorder %v1049, 8.507059e+37
        %v1051 = vand.u32 %v1031, 2147483648
        %v1052 = vor.u32 1.1754944e-38, %v1051
        %v1053 = vsel %vm1050, %v1052, %v1048
        %v1054 = vrcp.pop %v1033
        %v1055 = vmul.f32 %v1033, %v1054
        %v1056 = vsub.f32 1.0, %v1055
        %v1057 = vmul.f32 %v1054, %v1056
        %v1058 = vadd.f32 %v1054, %v1057
        %vm1059 = vweird.f32 %v1033
        %vm1060 = vweird.f32 %v1054
        %vm1061 = vmor %vm1059, %vm1060
        %v1062 = vsel %vm1061, %v1054, %v1058
        %v1063 = vand.u32 2147483647, %v1033
        %vm1064 = vcmp.eq.f32.partialorder %v1063, 8.507059e+37
        %v1065 = vand.u32 %v1033, 2147483648
        %v1066 = vor.u32 1.1754944e-38, %v1065
        %v1067 = vsel %vm1064, %v1066, %v1062
        %v1068 = vrcp.pop %v1036
        %v1069 = vmul.f32 %v1036, %v1068
        %v1070 = vsub.f32 1.0, %v1069
        %v1071 = vmul.f32 %v1068, %v1070
        %v1072 = vadd.f32 %v1068, %v1071
        %vm1073 = vweird.f32 %v1036
        %vm1074 = vweird.f32 %v1068
        %vm1075 = vmor %vm1073, %vm1074
        %v1076 = vsel %vm1075, %v1068, %v1072
        %v1077 = vand.u32 2147483647, %v1036
        %vm1078 = vcmp.eq.f32.partialorder %v1077, 8.507059e+37
        %v1079 = vand.u32 %v1036, 2147483648
        %v1080 = vor.u32 1.1754944e-38, %v1079
        %v1081 = vsel %vm1078, %v1080, %v1076
        %v1082 = vrcp.pop %v1038
        %v1083 = vmul.f32 %v1038, %v1082
        %v1084 = vsub.f32 1.0, %v1083
        %v1085 = vmul.f32 %v1082, %v1084
        %v1086 = vadd.f32 %v1082, %v1085
        %vm1087 = vweird.f32 %v1038
        %vm1088 = vweird.f32 %v1082
        %vm1089 = vmor %vm1087, %vm1088
        %v1090 = vsel %vm1089, %v1082, %v1086
        %v1091 = vand.u32 2147483647, %v1038
        %vm1092 = vcmp.eq.f32.partialorder %v1091, 8.507059e+37
        %v1093 = vand.u32 %v1038, 2147483648
        %v1094 = vor.u32 1.1754944e-38, %v1093
        %v1095 = vsel %vm1092, %v1094, %v1090
        %1097 = vset.pattern.permute.xlu0 16
        %1098 = vperm.xlu0 %1097, %v1053
        %v1099 = vpop.permute.xlu0 %1098
        %1102 = vset.pattern.permute.xlu0 16
        %1103 = vperm.xlu0 %1102, %v1067
        %v1104 = vpop.permute.xlu0 %1103
        %1107 = vset.pattern.permute.xlu0 16
        %1108 = vperm.xlu0 %1107, %v1081
        %v1109 = vpop.permute.xlu0 %1108
        %1112 = vset.pattern.permute.xlu0 16
        %1113 = vperm.xlu0 %1112, %v1095
        %v1114 = vpop.permute.xlu0 %1113
        %v1116 = vmul.f32 %v1031, %v1099
        %v1117 = vmul.f32 %v1033, %v1104
        %v1118 = vmul.f32 %v1036, %v1109
        %v1119 = vmul.f32 %v1038, %v1114
        %v1120 = vadd.f32 %v889, %v1116
        %v1121 = vadd.f32 %v892, %v1117
        %v1122 = vadd.f32 %v895, %v1118
        %v1123 = vadd.f32 %v898, %v1119
        %v1124 = vsub.f32 %v1120, %v930
        %v1125 = vsub.f32 %v1121, %v931
        %v1126 = vsub.f32 %v1122, %v932
        %v1127 = vsub.f32 %v1123, %v933
        %1128 = vst [vmem:[%s7] sm:$0xff] %v1124
        %1129 = vst [vmem:[%s7 + $0x8] sm:$0xff] %v1125
        %1130 = vst [vmem:[%s7 + $0x10] sm:$0xff] %v1126
        %1131 = vst [vmem:[%s7 + $0x18] sm:$0xff] %v1127
      $region56: #{gdn_autoencoder_forward.1} parent=47 // pred_fallthru
        _
      // Predicated region
      $region57: #{gdn_autoencoder_forward.1} parent=47 // pred_check
        %p1132 = pneg %p183
      $region58: #{gdn_autoencoder_forward.1} parent=47 // pred_check_branch
        %1134 = sbr.rel (%p1132) target = $region60
      $region59: #{gdn_autoencoder_forward.1} parent=47 // pred_region
        _
      $region60: #{gdn_autoencoder_forward.1} parent=47 // pred_fallthru
        _
      // Predicated region
      $region61: #{gdn_autoencoder_forward.1} parent=47 // pred_check
        %p1135 = pneg %p183
      $region62: #{gdn_autoencoder_forward.1} parent=47 // pred_check_branch
        %1137 = sbr.rel (%p1135) target = $region64
      $region63: #{gdn_autoencoder_forward.1} parent=47 // pred_region
        _
      $region64: #{gdn_autoencoder_forward.1} parent=47 // pred_fallthru
        _
    $region48: #{gdn_autoencoder_forward.1} parent=5 // pred_fallthru
      _
    %p1138 = scmp.le.s32.totalorder 2, %s13
    // Predicated region
    $region65: #{gdn_autoencoder_forward.1} parent=5 // pred_check
      %p1139 = pneg %p1138
    $region66: #{gdn_autoencoder_forward.1} parent=5 // pred_check_branch
      %1141 = sbr.rel (%p1139) target = $region68
    $region67: #{gdn_autoencoder_forward.1} parent=5 // pred_region
      %s1142 = ssub.s32 %s13, 2
    $region68: #{gdn_autoencoder_forward.1} parent=5 // pred_fallthru
      _
  $region6: #{gdn_autoencoder_forward.1} parent=0 // loop_footer
    %s17 = sadd.s32 1, %s13
  $region7: #{gdn_autoencoder_forward.1} parent=0 // loop_footer_branch
    %12 = sbr.rel target = $region3
  $region8: #{gdn_autoencoder_forward.1} parent=0 // loop_exit
    _

</llo_original>
